<compile_context>
chip_gen: v7x
topology: tpu7x:2x2x1
jax: 0.10.0
libtpu: 0.0.40
codegen_flags: <defaults>
</compile_context>

<pallas_src>
import jax
import jax.numpy as jnp
from jax.experimental import pallas as pl
from jax.experimental.pallas import tpu as pltpu

PATCH = 32  # EfficientNetV2-S feature stride


# ----------------------------- kernels ---------------------------------------
def _kernel_single(p_ref, w_ref, sb_ref, a_ref, pb_ref, o_ref):
    """Single K shot: full (K, cf) weight resident, no accumulator scratch."""
    y = jnp.dot(p_ref[0], w_ref[...], preferred_element_type=jnp.float32)
    y = y + sb_ref[...]                       # (tm, cf) + (1, cf)
    y = y * jax.nn.sigmoid(y)                 # SiLU
    # Fused AvgPool(1/hp) + 1x1 projection: one block-diagonal f32 matmul.
    out = jnp.dot(a_ref[...], y, preferred_element_type=jnp.float32)
    o_ref[0] = (out + pb_ref[...]).astype(o_ref.dtype)


def _kernel_multi(p_ref, w_ref, sb_ref, a_ref, pb_ref, o_ref, acc_ref):
    """K-tiled fallback (large K): f32 accumulator, finalize on last K tile."""
    k = pl.program_id(1)

    @pl.when(k == 0)
    def _():
        acc_ref[...] = jnp.zeros_like(acc_ref)

    acc_ref[...] += jnp.dot(p_ref[0], w_ref[...],
                            preferred_element_type=jnp.float32)

    @pl.when(k == pl.num_programs(1) - 1)
    def _():
        y = acc_ref[...] + sb_ref[...]
        y = y * jax.nn.sigmoid(y)
        out = jnp.dot(a_ref[...], y, preferred_element_type=jnp.float32)
        o_ref[0] = (out + pb_ref[...]).astype(o_ref.dtype)


# ----------------------------- tiling heuristics ------------------------------
def _pick_batches_per_tile(B, mb, target_rows=256):
    """Divisor of B s.t. rows-per-tile <= target_rows; prefer >= 2 M tiles."""
    divs = [d for d in range(1, B + 1) if B % d == 0]
    fits = [d for d in divs if d * mb <= target_rows] or [1]
    multi = [d for d in fits if B // d >= 2]
    return max(multi) if multi else max(fits)


def _pick_k_tile(K, tm, cf, budget_bytes=16 * 1024 * 1024):
    """Largest lane-aligned K tile whose double-buffered blocks fit the budget."""
    assert K % 128 == 0, "K must be a multiple of the lane width"
    per_k = 2 * 2 * (tm + cf)            # bf16 patch + weight, double-buffered
    tk_cap = max(128, (budget_bytes // per_k) // 128 * 128)
    if K <= tk_cap:
        return K, 1
    for cand in range(tk_cap, 127, -128):  # largest multiple of 128 dividing K
        if K % cand == 0:
            return cand, K // cand
    raise AssertionError("no valid K tile found")


# ----------------------------- fused forward ----------------------------------
def fused_forward(patches, stem_w, stem_b, proj_a, proj_bias, *, tk, kt):
    """patches: (num_m, tm, K) bf16; returns (num_m, rows_out, cf) f32."""
    num_m, tm, K = patches.shape
    rows_out = proj_a.shape[0]
    cf = stem_w.shape[1]

    if kt == 1:
        kernel = _kernel_single
        grid = (num_m,)
        semantics = ("parallel",)
        in_specs = [
            pl.BlockSpec((1, tm, K), lambda m: (m, 0, 0)),
            pl.BlockSpec((K, cf), lambda m: (0, 0)),       # resident, one DMA
            pl.BlockSpec((1, cf), lambda m: (0, 0)),
            pl.BlockSpec((rows_out, tm), lambda m: (0, 0)),
            pl.BlockSpec((rows_out, 1), lambda m: (0, 0)),
        ]
        out_spec = pl.BlockSpec((1, rows_out, cf), lambda m: (m, 0, 0))
        scratch = []
    else:
        kernel = _kernel_multi
        grid = (num_m, kt)
        semantics = ("parallel", "arbitrary")
        in_specs = [
            pl.BlockSpec((1, tm, tk), lambda m, k: (m, 0, k)),
            # Weight tiles re-fetched per M tile only (num_m is small after
            # batch folding); this path only triggers for very large K.
            pl.BlockSpec((tk, cf), lambda m, k: (k, 0)),
            pl.BlockSpec((1, cf), lambda m, k: (0, 0)),
            pl.BlockSpec((rows_out, tm), lambda m, k: (0, 0)),
            pl.BlockSpec((rows_out, 1), lambda m, k: (0, 0)),
        ]
        out_spec = pl.BlockSpec((1, rows_out, cf), lambda m, k: (m, 0, 0))
        scratch = [pltpu.VMEM((tm, cf), jnp.float32)]

    return pl.pallas_call(
        kernel,
        out_shape=jax.ShapeDtypeStruct((num_m, rows_out, cf), jnp.float32),
        grid_spec=pltpu.PrefetchScalarGridSpec(
            num_scalar_prefetch=0,
            grid=grid,
            in_specs=in_specs,
            out_specs=out_spec,
            scratch_shapes=scratch,
        ),
        compiler_params=pltpu.CompilerParams(
            dimension_semantics=semantics,
            # Fits with headroom on every generation (v7x physical VMEM = 64 MiB).
            vmem_limit_bytes=32 * 1024 * 1024,
        ),
    )(patches, stem_w, stem_b, proj_a, proj_bias)


# -------------------------------- Module --------------------------------------
class FeatureExtractorPallas:
    """Pallas version of FeatureExtractor with a synthetic stride-32 backbone."""

    def __init__(self, input_size=(64, 128), output_len=8, in_channels=3,
                 feat_channels=32, key=jax.random.PRNGKey(42)):
        h, w = input_size
        assert h % PATCH == 0 and w % PATCH == 0
        self.hp, self.wp = h // PATCH, w // PATCH
        self.cf = feat_channels
        self.output_len = output_len
        self.in_channels = in_channels
        k1, k2, k3, k4 = jax.random.split(key, 4)
        kdim = in_channels * PATCH * PATCH
        self.stem_w = (jax.random.normal(k1, (kdim, feat_channels), jnp.float32)
                       / jnp.sqrt(kdim).astype(jnp.float32))
        self.stem_w_bf16 = self.stem_w.astype(jnp.bfloat16)
        self.stem_b = jax.random.normal(k2, (1, feat_channels), jnp.float32) * 0.01
        # proj = Conv2d(w // 32, output_len, kernel_size=1): weight (L, wp)
        self.proj_w = (jax.random.normal(k3, (output_len, self.wp), jnp.float32)
                       / jnp.sqrt(self.wp).astype(jnp.float32))
        self.proj_b = jax.random.normal(k4, (output_len, 1), jnp.float32) * 0.01

    def __call__(self, x):
        B, C, H, W = x.shape
        hp, wp = self.hp, self.wp
        assert C == self.in_channels and H == hp * PATCH and W == wp * PATCH
        mb = hp * wp
        K = C * PATCH * PATCH

        # im2row patch extraction (layout plumbing only), rows ordered (b, i, j).
        # Cast to bf16 BEFORE the transpose so the wrapper pass writes bf16.
        xb = x.astype(jnp.bfloat16)
        patches = xb.reshape(B, C, hp, PATCH, wp, PATCH)
        patches = jnp.transpose(patches, (0, 2, 4, 1, 3, 5))

        # Fold batch into the MXU M axis.
        bpt = _pick_batches_per_tile(B, mb)
        num_m = B // bpt
        tm = bpt * mb
        patches = patches.reshape(num_m, tm, K)

        tk, kt = _pick_k_tile(K, tm, self.cf)

        # Fold AvgPool(1/hp) + 1x1 projection into one block-diagonal matrix:
        # A[(b,l), (b,i,j)] = proj_w[l, j] / hp.
        a1 = jnp.einsum('lw,h->lhw', self.proj_w,
                        jnp.ones((hp,), jnp.float32)) / hp
        a1 = a1.reshape(self.output_len, mb)                      # (L, hp*wp)
        proj_a = jnp.kron(jnp.eye(bpt, dtype=jnp.float32), a1)    # (bpt*L, tm)
        proj_bias = jnp.tile(self.proj_b, (bpt, 1))               # (bpt*L, 1)

        out = fused_forward(patches, self.stem_w_bf16, self.stem_b,
                            proj_a, proj_bias, tk=tk, kt=kt)
        out = out.reshape(B, self.output_len, self.cf)            # (B, L, Cf)
        # match torch output layout: B x 1 x C x output_len
        return jnp.transpose(out, (0, 2, 1))[:, None, :, :]


def reference(model, x):
    """Pure-JAX (f32) reference of the same forward pass."""
    B, C, H, W = x.shape
    hp, wp = model.hp, model.wp
    patches = x.reshape(B, C, hp, PATCH, wp, PATCH)
    patches = jnp.transpose(patches, (0, 2, 4, 1, 3, 5)).reshape(B, hp * wp, -1)
    y = patches @ model.stem_w + model.stem_b
    y = y * jax.nn.sigmoid(y)
    feats = y.reshape(B, hp, wp, model.cf)
    pooled = feats.mean(axis=1)                                    # (B, wp, Cf)
    out = jnp.einsum('bwc,lw->blc', pooled, model.proj_w) + model.proj_b
    return jnp.transpose(out, (0, 2, 1))[:, None, :, :]


if __name__ == "__main__":
    key = jax.random.PRNGKey(0)
    B, C, H, W = 2, 3, 64, 128
    x = jax.random.normal(key, (B, C, H, W), jnp.float32)

    model = FeatureExtractorPallas(input_size=(H, W), output_len=8,
                                   in_channels=C, feat_channels=32)

    out = model(x)
    out = jax.block_until_ready(out)

    ref = reference(model, x)
    assert out.shape == (B, 1, model.cf, model.output_len), out.shape
    # bf16 MXU inputs (f32 accumulation) -> relaxed tolerance vs f32 reference.
    err = float(jnp.max(jnp.abs(out - ref)))
    assert jnp.allclose(out, ref, atol=5e-2, rtol=5e-2), err

    print("KERNEL_OK")
</pallas_src>

<mosaic_0001>
module attributes {stable_mosaic.version = 11 : i64} {
  func.func @_kernel_single(%arg0: i32, %arg1: memref<1x8x3072xbf16, #tpu.memory_space<vmem>>, %arg2: memref<3072x32xbf16, #tpu.memory_space<vmem>>, %arg3: memref<1x32xf32, #tpu.memory_space<vmem>>, %arg4: memref<8x8xf32, #tpu.memory_space<vmem>>, %arg5: memref<8x1xf32, #tpu.memory_space<vmem>>, %arg6: memref<1x8x32xf32, #tpu.memory_space<vmem>>) attributes {dimension_semantics = [#tpu.dimension_semantics<parallel>], iteration_bounds = array<i64: 2>, scalar_prefetch = 0 : i64, scratch_operands = 0 : i64, tpu.core_type = #tpu.core_type<tc>, window_params = [{transform_indices = @transform_0, window_bounds = array<i64: 1, 8, 3072>}, {pipeline_mode = #tpu.pipeline_mode<synchronous>, transform_indices = @transform_1, window_bounds = array<i64: 3072, 32>}, {pipeline_mode = #tpu.pipeline_mode<synchronous>, transform_indices = @transform_2, window_bounds = array<i64: 1, 32>}, {pipeline_mode = #tpu.pipeline_mode<synchronous>, transform_indices = @transform_3, window_bounds = array<i64: 8, 8>}, {pipeline_mode = #tpu.pipeline_mode<synchronous>, transform_indices = @transform_4, window_bounds = array<i64: 8, 1>}, {transform_indices = @transform_5, window_bounds = array<i64: 1, 8, 32>}]} {
    %c0 = arith.constant 0 : index
    %c0_0 = arith.constant 0 : index
    %c0_1 = arith.constant 0 : index
    %0 = vector.load %arg1[%c0, %c0_0, %c0_1] : memref<1x8x3072xbf16, #tpu.memory_space<vmem>>, vector<1x8x3072xbf16>
    %1 = vector.shape_cast %0 : vector<1x8x3072xbf16> to vector<8x3072xbf16>
    %c0_2 = arith.constant 0 : index
    %c0_3 = arith.constant 0 : index
    %2 = vector.load %arg2[%c0_2, %c0_3] : memref<3072x32xbf16, #tpu.memory_space<vmem>>, vector<3072x32xbf16>
    %cst = arith.constant dense<0.000000e+00> : vector<8x32xf32>
    %3 = tpu.matmul %1, %2, %cst {dimension_numbers = #tpu.dot_dimension_numbers<[1], [0], [0], [1], [0, 0, 1, 1], [], []>} : vector<8x3072xbf16>, vector<3072x32xbf16>, vector<8x32xf32> -> vector<8x32xf32>
    %c0_4 = arith.constant 0 : index
    %c0_5 = arith.constant 0 : index
    %4 = vector.load %arg3[%c0_4, %c0_5] : memref<1x32xf32, #tpu.memory_space<vmem>>, vector<1x32xf32>
    %5 = vector.broadcast %4 : vector<1x32xf32> to vector<8x32xf32>
    %6 = arith.addf %3, %5 : vector<8x32xf32>
    %7 = arith.negf %6 : vector<8x32xf32>
    %8 = math.exp %7 : vector<8x32xf32>
    %cst_6 = arith.constant 1.000000e+00 : f32
    %9 = vector.broadcast %cst_6 : f32 to vector<8x32xf32>
    %10 = arith.addf %9, %8 : vector<8x32xf32>
    %11 = arith.divf %9, %10 : vector<8x32xf32>
    %12 = arith.mulf %6, %11 : vector<8x32xf32>
    %c0_7 = arith.constant 0 : index
    %c0_8 = arith.constant 0 : index
    %13 = vector.load %arg4[%c0_7, %c0_8] : memref<8x8xf32, #tpu.memory_space<vmem>>, vector<8x8xf32>
    %cst_9 = arith.constant dense<0.000000e+00> : vector<8x32xf32>
    %14 = tpu.matmul %13, %12, %cst_9 {dimension_numbers = #tpu.dot_dimension_numbers<[1], [0], [0], [1], [0, 0, 1, 1], [], []>} : vector<8x8xf32>, vector<8x32xf32>, vector<8x32xf32> -> vector<8x32xf32>
    %c0_10 = arith.constant 0 : index
    %c0_11 = arith.constant 0 : index
    %15 = vector.load %arg5[%c0_10, %c0_11] : memref<8x1xf32, #tpu.memory_space<vmem>>, vector<8x1xf32>
    %16 = vector.broadcast %15 : vector<8x1xf32> to vector<8x32xf32>
    %17 = arith.addf %14, %16 : vector<8x32xf32>
    %c0_12 = arith.constant 0 : index
    %c0_13 = arith.constant 0 : index
    %c0_14 = arith.constant 0 : index
    %18 = vector.load %arg6[%c0_12, %c0_13, %c0_14] : memref<1x8x32xf32, #tpu.memory_space<vmem>>, vector<1x8x32xf32>
    %19 = vector.shape_cast %18 : vector<1x8x32xf32> to vector<8x32xf32>
    %20 = vector.shape_cast %17 : vector<8x32xf32> to vector<1x8x32xf32>
    tpu.vector_store %arg6[%c0_12, %c0_13, %c0_14], %20 {strides = array<i32>} : memref<1x8x32xf32, #tpu.memory_space<vmem>>, vector<1x8x32xf32>,
    return
  }
  func.func @transform_0(%arg0: i32) -> (i32, i32, i32) {
    %c0_i32 = arith.constant 0 : i32
    %c0_i32_0 = arith.constant 0 : i32
    %c0_i32_1 = arith.constant 0 : i32
    return %arg0, %c0_i32, %c0_i32_0 : i32, i32, i32
  }
  func.func @transform_1(%arg0: i32) -> (i32, i32) {
    %c0_i32 = arith.constant 0 : i32
    %c0_i32_0 = arith.constant 0 : i32
    %c0_i32_1 = arith.constant 0 : i32
    return %c0_i32, %c0_i32_0 : i32, i32
  }
  func.func @transform_2(%arg0: i32) -> (i32, i32) {
    %c0_i32 = arith.constant 0 : i32
    %c0_i32_0 = arith.constant 0 : i32
    %c0_i32_1 = arith.constant 0 : i32
    return %c0_i32, %c0_i32_0 : i32, i32
  }
  func.func @transform_3(%arg0: i32) -> (i32, i32) {
    %c0_i32 = arith.constant 0 : i32
    %c0_i32_0 = arith.constant 0 : i32
    %c0_i32_1 = arith.constant 0 : i32
    return %c0_i32, %c0_i32_0 : i32, i32
  }
  func.func @transform_4(%arg0: i32) -> (i32, i32) {
    %c0_i32 = arith.constant 0 : i32
    %c0_i32_0 = arith.constant 0 : i32
    %c0_i32_1 = arith.constant 0 : i32
    return %c0_i32, %c0_i32_0 : i32, i32
  }
  func.func @transform_5(%arg0: i32) -> (i32, i32, i32) {
    %c0_i32 = arith.constant 0 : i32
    %c0_i32_0 = arith.constant 0 : i32
    %c0_i32_1 = arith.constant 0 : i32
    return %arg0, %c0_i32, %c0_i32_0 : i32, i32, i32
  }
}

</mosaic_0001>

<llo_original>
// kernel: tpu_custom_call.1
$region0: #{tpu_custom_call.1}
  #allocation0 [shape = 'u32[]', space=smem, size = 0x4, offset = 0x4, fixed_abs, tag = 'smem constant byte address 0x4 - core index']
  #allocation1 [shape = 'u32[144,128]{1,0:T(1,128)}', space=vmem, size = 0x12000, scoped, tag = 'internal scratch']
  %s0 = inlined_call_operand.vmem [shape: bf16[2,8,3072], index: 0, kind: input, shape index: {}]
  %s1 = inlined_call_operand.vmem [shape: bf16[3072,32], index: 1, kind: input, shape index: {}]
  %s2 = inlined_call_operand.vmem [shape: f32[1,32], index: 2, kind: input, shape index: {}]
  %s3 = inlined_call_operand.vmem [shape: f32[8,8], index: 3, kind: input, shape index: {}]
  %s4 = inlined_call_operand.vmem [shape: f32[8,1], index: 4, kind: input, shape index: {}]
  %s5 = inlined_call_operand.hbm [shape: f32[2,8,32], index: 5, kind: output, shape index: {}]
  %s6 = sld [smem:[#allocation0]]
  $region53: #{tpu_custom_call.1} parent=0
    _
  %s8 = ssub.s32 1, %s6
  %s9 = scalar_select 0, %s8, %s6
  $region1: #{tpu_custom_call.1} parent=0
    #allocation2 [shape = 'u8[8192]{0}', space=vmem, size = 0x2000, scoped, tag = 'output window, operand 0']
    #allocation3 [shape = 's32[2]{0}', space=sflag, size = 0x8, scoped, tag = 'scoped memory for tpu_custom_call.1']
    %10 = vsyncpa [#allocation3], 0
    %s11 = scalar_lea.sflag [#allocation3], 1
    %12 = vsyncpa %s11, 0
    loop: start=0, step=1, limit=4
    $region2: #{tpu_custom_call.1} parent=1 // loop_pre_header
      _
    $region3: #{tpu_custom_call.1} parent=1 // loop_header
      %s14 = sphi 0, %s18
      %p15 = scmp.ge.s32.totalorder %s14, 4
      %s24 = sphi 0, %s26
      %s27 = sphi 0, %s24
      %s28 = sphi 0, %s27
      %s44 = sphi 0, %s28
      %s48 = sphi 0, %s48
      %s50 = sphi 0, %s48
      %s51 = sphi 0, %s50
      %s65 = sphi 0, %s51
      %s69 = sphi 0, %s69
      %s71 = sphi 0, %s69
      %s72 = sphi 0, %s71
      %s86 = sphi 0, %s72
      %s90 = sphi 0, %s90
      %s92 = sphi 0, %s90
      %s93 = sphi 0, %s92
      %s107 = sphi 0, %s93
      %s111 = sphi 0, %s111
      %s113 = sphi 0, %s111
      %s114 = sphi 0, %s113
      %s128 = sphi 0, %s114
      %s134 = sphi 0, %s136
      %s137 = sphi 0, %s134
      %s138 = sphi 0, %s137
      %s154 = sphi 0, %s138
    $region4: #{tpu_custom_call.1} parent=1 // loop_header_branch
      %17 = sbr.rel (%p15) target = $region8
    $region5: #{tpu_custom_call.1} parent=1 // loop_body
      %s19 = ssub.s32 %s14, 1
      %s20 = ssub.s32 %s14, 2
      %s21 = sadd.s32 %s14, 1
      %s22 = ssub.s32 %s14, %s21
      %p23 = scmp.eq.s32.totalorder %s22, 0
      %s25 = sadd.s32 %s24, 1
      %s26 = scalar_select %p23, %s24, %s25
      %p29 = pneg %p23
      %p30 = scmp.eq.s32.totalorder %s14, 1
      %p31 = por %p29, %p30
      %p32 = scmp.ne.s32.totalorder %s24, %s27
      %p33 = scmp.eq.s32.totalorder %s14, 0
      %p34 = por %p32, %p33
      %p35 = scmp.ne.s32.totalorder %s24, %s27
      %p36 = scmp.eq.s32.totalorder %s19, 1
      %p37 = por %p35, %p36
      %p38 = scmp.ne.s32.totalorder %s27, %s28
      %p39 = scmp.eq.s32.totalorder %s19, 0
      %p40 = por %p38, %p39
      %p41 = scmp.ne.s32.totalorder %s27, %s28
      %p42 = scmp.eq.s32.totalorder %s20, 1
      %p43 = por %p41, %p42
      %p45 = scmp.ne.s32.totalorder %s28, %s44
      %p46 = scmp.eq.s32.totalorder %s20, 0
      %p47 = por %p45, %p46
      %s49 = sadd.s32 %s48, 1
      %p52 = scmp.eq.s32.totalorder %s14, 1
      %p53 = scmp.ne.s32.totalorder %s48, %s50
      %p54 = scmp.eq.s32.totalorder %s14, 0
      %p55 = por %p53, %p54
      %p56 = scmp.ne.s32.totalorder %s48, %s50
      %p57 = scmp.eq.s32.totalorder %s19, 1
      %p58 = por %p56, %p57
      %p59 = scmp.ne.s32.totalorder %s50, %s51
      %p60 = scmp.eq.s32.totalorder %s19, 0
      %p61 = por %p59, %p60
      %p62 = scmp.ne.s32.totalorder %s50, %s51
      %p63 = scmp.eq.s32.totalorder %s20, 1
      %p64 = por %p62, %p63
      %p66 = scmp.ne.s32.totalorder %s51, %s65
      %p67 = scmp.eq.s32.totalorder %s20, 0
      %p68 = por %p66, %p67
      %s70 = sadd.s32 %s69, 1
      %p73 = scmp.eq.s32.totalorder %s14, 1
      %p74 = scmp.ne.s32.totalorder %s69, %s71
      %p75 = scmp.eq.s32.totalorder %s14, 0
      %p76 = por %p74, %p75
      %p77 = scmp.ne.s32.totalorder %s69, %s71
      %p78 = scmp.eq.s32.totalorder %s19, 1
      %p79 = por %p77, %p78
      %p80 = scmp.ne.s32.totalorder %s71, %s72
      %p81 = scmp.eq.s32.totalorder %s19, 0
      %p82 = por %p80, %p81
      %p83 = scmp.ne.s32.totalorder %s71, %s72
      %p84 = scmp.eq.s32.totalorder %s20, 1
      %p85 = por %p83, %p84
      %p87 = scmp.ne.s32.totalorder %s72, %s86
      %p88 = scmp.eq.s32.totalorder %s20, 0
      %p89 = por %p87, %p88
      %s91 = sadd.s32 %s90, 1
      %p94 = scmp.eq.s32.totalorder %s14, 1
      %p95 = scmp.ne.s32.totalorder %s90, %s92
      %p96 = scmp.eq.s32.totalorder %s14, 0
      %p97 = por %p95, %p96
      %p98 = scmp.ne.s32.totalorder %s90, %s92
      %p99 = scmp.eq.s32.totalorder %s19, 1
      %p100 = por %p98, %p99
      %p101 = scmp.ne.s32.totalorder %s92, %s93
      %p102 = scmp.eq.s32.totalorder %s19, 0
      %p103 = por %p101, %p102
      %p104 = scmp.ne.s32.totalorder %s92, %s93
      %p105 = scmp.eq.s32.totalorder %s20, 1
      %p106 = por %p104, %p105
      %p108 = scmp.ne.s32.totalorder %s93, %s107
      %p109 = scmp.eq.s32.totalorder %s20, 0
      %p110 = por %p108, %p109
      %s112 = sadd.s32 %s111, 1
      %p115 = scmp.eq.s32.totalorder %s14, 1
      %p116 = scmp.ne.s32.totalorder %s111, %s113
      %p117 = scmp.eq.s32.totalorder %s14, 0
      %p118 = por %p116, %p117
      %p119 = scmp.ne.s32.totalorder %s111, %s113
      %p120 = scmp.eq.s32.totalorder %s19, 1
      %p121 = por %p119, %p120
      %p122 = scmp.ne.s32.totalorder %s113, %s114
      %p123 = scmp.eq.s32.totalorder %s19, 0
      %p124 = por %p122, %p123
      %p125 = scmp.ne.s32.totalorder %s113, %s114
      %p126 = scmp.eq.s32.totalorder %s20, 1
      %p127 = por %p125, %p126
      %p129 = scmp.ne.s32.totalorder %s114, %s128
      %p130 = scmp.eq.s32.totalorder %s20, 0
      %p131 = por %p129, %p130
      %s132 = ssub.s32 %s14, %s21
      %p133 = scmp.eq.s32.totalorder %s132, 0
      %s135 = sadd.s32 %s134, 1
      %s136 = scalar_select %p133, %s134, %s135
      %p139 = pneg %p133
      %p140 = scmp.eq.s32.totalorder %s14, 1
      %p141 = por %p139, %p140
      %p142 = scmp.ne.s32.totalorder %s134, %s137
      %p143 = scmp.eq.s32.totalorder %s14, 0
      %p144 = por %p142, %p143
      %p145 = scmp.ne.s32.totalorder %s134, %s137
      %p146 = scmp.eq.s32.totalorder %s19, 1
      %p147 = por %p145, %p146
      %p148 = scmp.ne.s32.totalorder %s137, %s138
      %p149 = scmp.eq.s32.totalorder %s19, 0
      %p150 = por %p148, %p149
      %p151 = scmp.ne.s32.totalorder %s137, %s138
      %p152 = scmp.eq.s32.totalorder %s20, 1
      %p153 = por %p151, %p152
      %p155 = scmp.ne.s32.totalorder %s138, %s154
      %p156 = scmp.eq.s32.totalorder %s20, 0
      %p157 = por %p155, %p156
      %p158 = scmp.le.s32.totalorder 1, %s14
      %p159 = scmp.lt.s32.totalorder %s14, 3
      %p160 = pnand %p158, %p159
      %p161 = pneg %p160
      // Predicated region
      $region9: #{tpu_custom_call.1} parent=5 // pred_check
        _
      $region10: #{tpu_custom_call.1} parent=5 // pred_check_branch
        %163 = sbr.rel (%p160) target = $region12
      $region11: #{tpu_custom_call.1} parent=5 // pred_region
        %s164 = ssub.s32 %s14, 1
        // Predicated region
        $region13: #{tpu_custom_call.1} parent=11 // pred_check
          %p165 = pneg %p61
        $region14: #{tpu_custom_call.1} parent=11 // pred_check_branch
          %167 = sbr.rel (%p165) target = $region16
        $region15: #{tpu_custom_call.1} parent=11 // pred_region
          _
        $region16: #{tpu_custom_call.1} parent=11 // pred_fallthru
          _
        // Predicated region
        $region17: #{tpu_custom_call.1} parent=11 // pred_check
          %p168 = pneg %p82
        $region18: #{tpu_custom_call.1} parent=11 // pred_check_branch
          %170 = sbr.rel (%p168) target = $region20
        $region19: #{tpu_custom_call.1} parent=11 // pred_region
          _
        $region20: #{tpu_custom_call.1} parent=11 // pred_fallthru
          _
        // Predicated region
        $region21: #{tpu_custom_call.1} parent=11 // pred_check
          %p171 = pneg %p103
        $region22: #{tpu_custom_call.1} parent=11 // pred_check_branch
          %173 = sbr.rel (%p171) target = $region24
        $region23: #{tpu_custom_call.1} parent=11 // pred_region
          _
        $region24: #{tpu_custom_call.1} parent=11 // pred_fallthru
          _
        // Predicated region
        $region25: #{tpu_custom_call.1} parent=11 // pred_check
          %p174 = pneg %p124
        $region26: #{tpu_custom_call.1} parent=11 // pred_check_branch
          %176 = sbr.rel (%p174) target = $region28
        $region27: #{tpu_custom_call.1} parent=11 // pred_region
          _
        $region28: #{tpu_custom_call.1} parent=11 // pred_fallthru
          _
      $region12: #{tpu_custom_call.1} parent=5 // pred_fallthru
        _
      %p177 = scmp.lt.s32.totalorder %s14, 2
      // Predicated region
      $region29: #{tpu_custom_call.1} parent=5 // pred_check
        %p178 = pneg %p177
      $region30: #{tpu_custom_call.1} parent=5 // pred_check_branch
        %180 = sbr.rel (%p178) target = $region32
      $region31: #{tpu_custom_call.1} parent=5 // pred_region
        // Predicated region
        $region33: #{tpu_custom_call.1} parent=31 // pred_check
          %p181 = pneg %p34
        $region34: #{tpu_custom_call.1} parent=31 // pred_check_branch
          %183 = sbr.rel (%p181) target = $region36
        $region35: #{tpu_custom_call.1} parent=31 // pred_region
          %p184 = scmp.lt.s32.totalorder %s14, 1
          %s185 = scalar_select %p184, %s14, 1
          %s186 = smul.addr %s185, 24
          %s187 = smul.addr %s186, 4
          %s188 = scalar_lea.vmem %s0, %s187
        $region36: #{tpu_custom_call.1} parent=31 // pred_fallthru
          _
      $region32: #{tpu_custom_call.1} parent=5 // pred_fallthru
        _
      %p189 = scmp.le.s32.totalorder 1, %s14
      %p190 = scmp.lt.s32.totalorder %s14, 3
      %p191 = pnand %p189, %p190
      %p192 = pneg %p191
      // Predicated region
      $region37: #{tpu_custom_call.1} parent=5 // pred_check
        _
      $region38: #{tpu_custom_call.1} parent=5 // pred_check_branch
        %194 = sbr.rel (%p191) target = $region40
      $region39: #{tpu_custom_call.1} parent=5 // pred_region
        %s195 = ssub.s32 %s14, 1
        %p196 = scmp.lt.s32.totalorder %s19, 1
        %s197 = scalar_select %p196, %s19, 1
        %s198 = smul.addr %s197, 24
        %s199 = smul.addr %s198, 4
        %s200 = scalar_lea.vmem %s0, %s199
        %p201 = pneg %p40
        %p202 = pneg %p37
        %p203 = pneg %p61
        %p204 = pneg %p58
        %p205 = pneg %p82
        %p206 = pneg %p79
        %p207 = pneg %p103
        %p208 = pneg %p100
        %p209 = pneg %p124
        %p210 = pneg %p121
        %p211 = pneg %p150
        %p212 = pneg %p147
        %s213 = sand.u32 %s137, 1
        %s214 = scalar_lea.sflag [#allocation3], %s213
        %s215 = sand.u32 %s137, 1
        %s216 = smul.addr %s215, 8
        %s217 = scalar_lea.vmem [#allocation2], %s216
        %p218 = scmp.lt.s32.totalorder %s19, 1
        %s219 = scalar_select %p218, %s19, 1
        %s220 = smul.addr %s219, 24
        %s221 = smul.addr %s220, 4
        %s222 = scalar_lea.vmem %s0, %s221
        %v224 = vld [vmem:[%s222] sm:$0xff]
        %v225 = vld [vmem:[%s222 + $0x8] sm:$0xff]
        %v226 = vld [vmem:[%s222 + $0x10] sm:$0xff]
        %v227 = vld [vmem:[%s222 + $0x18] sm:$0xff]
        %v228 = vld [vmem:[%s222 + $0x20] sm:$0xff]
        %v229 = vld [vmem:[%s222 + $0x28] sm:$0xff]
        %v230 = vld [vmem:[%s222 + $0x30] sm:$0xff]
        %v231 = vld [vmem:[%s222 + $0x38] sm:$0xff]
        %v232 = vld [vmem:[%s222 + $0x40] sm:$0xff]
        %v233 = vld [vmem:[%s222 + $0x48] sm:$0xff]
        %v234 = vld [vmem:[%s222 + $0x50] sm:$0xff]
        %v235 = vld [vmem:[%s222 + $0x58] sm:$0xff]
        %v236 = vld [vmem:[%s1] sm:$0xf]
        %v237 = vld [vmem:[%s1 + $0x4] sm:$0xf]
        %v238 = vld [vmem:[%s1 + $0x8] sm:$0xf]
        %v239 = vld [vmem:[%s1 + $0xc] sm:$0xf]
        %v240 = vld [vmem:[%s1 + $0x10] sm:$0xf]
        %v241 = vld [vmem:[%s1 + $0x14] sm:$0xf]
        %v242 = vld [vmem:[%s1 + $0x18] sm:$0xf]
        %v243 = vld [vmem:[%s1 + $0x1c] sm:$0xf]
        %v244 = vld [vmem:[%s1 + $0x20] sm:$0xf]
        %v245 = vld [vmem:[%s1 + $0x24] sm:$0xf]
        %v246 = vld [vmem:[%s1 + $0x28] sm:$0xf]
        %v247 = vld [vmem:[%s1 + $0x2c] sm:$0xf]
        %v248 = vld [vmem:[%s1 + $0x30] sm:$0xf]
        %v249 = vld [vmem:[%s1 + $0x34] sm:$0xf]
        %v250 = vld [vmem:[%s1 + $0x38] sm:$0xf]
        %v251 = vld [vmem:[%s1 + $0x3c] sm:$0xf]
        %v252 = vld [vmem:[%s1 + $0x40] sm:$0xf]
        %v253 = vld [vmem:[%s1 + $0x44] sm:$0xf]
        %v254 = vld [vmem:[%s1 + $0x48] sm:$0xf]
        %v255 = vld [vmem:[%s1 + $0x4c] sm:$0xf]
        %v256 = vld [vmem:[%s1 + $0x50] sm:$0xf]
        %v257 = vld [vmem:[%s1 + $0x54] sm:$0xf]
        %v258 = vld [vmem:[%s1 + $0x58] sm:$0xf]
        %v259 = vld [vmem:[%s1 + $0x5c] sm:$0xf]
        %v260 = vld [vmem:[%s1 + $0x60] sm:$0xf]
        %v261 = vld [vmem:[%s1 + $0x64] sm:$0xf]
        %v262 = vld [vmem:[%s1 + $0x68] sm:$0xf]
        %v263 = vld [vmem:[%s1 + $0x6c] sm:$0xf]
        %v264 = vld [vmem:[%s1 + $0x70] sm:$0xf]
        %v265 = vld [vmem:[%s1 + $0x74] sm:$0xf]
        %v266 = vld [vmem:[%s1 + $0x78] sm:$0xf]
        %v267 = vld [vmem:[%s1 + $0x7c] sm:$0xf]
        %v268 = vld [vmem:[%s1 + $0x80] sm:$0xf]
        %v269 = vld [vmem:[%s1 + $0x84] sm:$0xf]
        %v270 = vld [vmem:[%s1 + $0x88] sm:$0xf]
        %v271 = vld [vmem:[%s1 + $0x8c] sm:$0xf]
        %v272 = vld [vmem:[%s1 + $0x90] sm:$0xf]
        %v273 = vld [vmem:[%s1 + $0x94] sm:$0xf]
        %v274 = vld [vmem:[%s1 + $0x98] sm:$0xf]
        %v275 = vld [vmem:[%s1 + $0x9c] sm:$0xf]
        %v276 = vld [vmem:[%s1 + $0xa0] sm:$0xf]
        %v277 = vld [vmem:[%s1 + $0xa4] sm:$0xf]
        %v278 = vld [vmem:[%s1 + $0xa8] sm:$0xf]
        %v279 = vld [vmem:[%s1 + $0xac] sm:$0xf]
        %v280 = vld [vmem:[%s1 + $0xb0] sm:$0xf]
        %v281 = vld [vmem:[%s1 + $0xb4] sm:$0xf]
        %v282 = vld [vmem:[%s1 + $0xb8] sm:$0xf]
        %v283 = vld [vmem:[%s1 + $0xbc] sm:$0xf]
        %v284 = vld [vmem:[%s1 + $0xc0] sm:$0xf]
        %v285 = vld [vmem:[%s1 + $0xc4] sm:$0xf]
        %v286 = vld [vmem:[%s1 + $0xc8] sm:$0xf]
        %v287 = vld [vmem:[%s1 + $0xcc] sm:$0xf]
        %v288 = vld [vmem:[%s1 + $0xd0] sm:$0xf]
        %v289 = vld [vmem:[%s1 + $0xd4] sm:$0xf]
        %v290 = vld [vmem:[%s1 + $0xd8] sm:$0xf]
        %v291 = vld [vmem:[%s1 + $0xdc] sm:$0xf]
        %v292 = vld [vmem:[%s1 + $0xe0] sm:$0xf]
        %v293 = vld [vmem:[%s1 + $0xe4] sm:$0xf]
        %v294 = vld [vmem:[%s1 + $0xe8] sm:$0xf]
        %v295 = vld [vmem:[%s1 + $0xec] sm:$0xf]
        %v296 = vld [vmem:[%s1 + $0xf0] sm:$0xf]
        %v297 = vld [vmem:[%s1 + $0xf4] sm:$0xf]
        %v298 = vld [vmem:[%s1 + $0xf8] sm:$0xf]
        %v299 = vld [vmem:[%s1 + $0xfc] sm:$0xf]
        %v300 = vld [vmem:[%s1 + $0x100] sm:$0xf]
        %v301 = vld [vmem:[%s1 + $0x104] sm:$0xf]
        %v302 = vld [vmem:[%s1 + $0x108] sm:$0xf]
        %v303 = vld [vmem:[%s1 + $0x10c] sm:$0xf]
        %v304 = vld [vmem:[%s1 + $0x110] sm:$0xf]
        %v305 = vld [vmem:[%s1 + $0x114] sm:$0xf]
        %v306 = vld [vmem:[%s1 + $0x118] sm:$0xf]
        %v307 = vld [vmem:[%s1 + $0x11c] sm:$0xf]
        %v308 = vld [vmem:[%s1 + $0x120] sm:$0xf]
        %v309 = vld [vmem:[%s1 + $0x124] sm:$0xf]
        %v310 = vld [vmem:[%s1 + $0x128] sm:$0xf]
        %v311 = vld [vmem:[%s1 + $0x12c] sm:$0xf]
        %v312 = vld [vmem:[%s1 + $0x130] sm:$0xf]
        %v313 = vld [vmem:[%s1 + $0x134] sm:$0xf]
        %v314 = vld [vmem:[%s1 + $0x138] sm:$0xf]
        %v315 = vld [vmem:[%s1 + $0x13c] sm:$0xf]
        %v316 = vld [vmem:[%s1 + $0x140] sm:$0xf]
        %v317 = vld [vmem:[%s1 + $0x144] sm:$0xf]
        %v318 = vld [vmem:[%s1 + $0x148] sm:$0xf]
        %v319 = vld [vmem:[%s1 + $0x14c] sm:$0xf]
        %v320 = vld [vmem:[%s1 + $0x150] sm:$0xf]
        %v321 = vld [vmem:[%s1 + $0x154] sm:$0xf]
        %v322 = vld [vmem:[%s1 + $0x158] sm:$0xf]
        %v323 = vld [vmem:[%s1 + $0x15c] sm:$0xf]
        %v324 = vld [vmem:[%s1 + $0x160] sm:$0xf]
        %v325 = vld [vmem:[%s1 + $0x164] sm:$0xf]
        %v326 = vld [vmem:[%s1 + $0x168] sm:$0xf]
        %v327 = vld [vmem:[%s1 + $0x16c] sm:$0xf]
        %v328 = vld [vmem:[%s1 + $0x170] sm:$0xf]
        %v329 = vld [vmem:[%s1 + $0x174] sm:$0xf]
        %v330 = vld [vmem:[%s1 + $0x178] sm:$0xf]
        %v331 = vld [vmem:[%s1 + $0x17c] sm:$0xf]
        %v332 = vld [vmem:[%s1 + $0x180] sm:$0xf]
        %v333 = vld [vmem:[%s1 + $0x184] sm:$0xf]
        %v334 = vld [vmem:[%s1 + $0x188] sm:$0xf]
        %v335 = vld [vmem:[%s1 + $0x18c] sm:$0xf]
        %v336 = vld [vmem:[%s1 + $0x190] sm:$0xf]
        %v337 = vld [vmem:[%s1 + $0x194] sm:$0xf]
        %v338 = vld [vmem:[%s1 + $0x198] sm:$0xf]
        %v339 = vld [vmem:[%s1 + $0x19c] sm:$0xf]
        %v340 = vld [vmem:[%s1 + $0x1a0] sm:$0xf]
        %v341 = vld [vmem:[%s1 + $0x1a4] sm:$0xf]
        %v342 = vld [vmem:[%s1 + $0x1a8] sm:$0xf]
        %v343 = vld [vmem:[%s1 + $0x1ac] sm:$0xf]
        %v344 = vld [vmem:[%s1 + $0x1b0] sm:$0xf]
        %v345 = vld [vmem:[%s1 + $0x1b4] sm:$0xf]
        %v346 = vld [vmem:[%s1 + $0x1b8] sm:$0xf]
        %v347 = vld [vmem:[%s1 + $0x1bc] sm:$0xf]
        %v348 = vld [vmem:[%s1 + $0x1c0] sm:$0xf]
        %v349 = vld [vmem:[%s1 + $0x1c4] sm:$0xf]
        %v350 = vld [vmem:[%s1 + $0x1c8] sm:$0xf]
        %v351 = vld [vmem:[%s1 + $0x1cc] sm:$0xf]
        %v352 = vld [vmem:[%s1 + $0x1d0] sm:$0xf]
        %v353 = vld [vmem:[%s1 + $0x1d4] sm:$0xf]
        %v354 = vld [vmem:[%s1 + $0x1d8] sm:$0xf]
        %v355 = vld [vmem:[%s1 + $0x1dc] sm:$0xf]
        %v356 = vld [vmem:[%s1 + $0x1e0] sm:$0xf]
        %v357 = vld [vmem:[%s1 + $0x1e4] sm:$0xf]
        %v358 = vld [vmem:[%s1 + $0x1e8] sm:$0xf]
        %v359 = vld [vmem:[%s1 + $0x1ec] sm:$0xf]
        %v360 = vld [vmem:[%s1 + $0x1f0] sm:$0xf]
        %v361 = vld [vmem:[%s1 + $0x1f4] sm:$0xf]
        %v362 = vld [vmem:[%s1 + $0x1f8] sm:$0xf]
        %v363 = vld [vmem:[%s1 + $0x1fc] sm:$0xf]
        %v364 = vld [vmem:[%s1 + $0x200] sm:$0xf]
        %v365 = vld [vmem:[%s1 + $0x204] sm:$0xf]
        %v366 = vld [vmem:[%s1 + $0x208] sm:$0xf]
        %v367 = vld [vmem:[%s1 + $0x20c] sm:$0xf]
        %v368 = vld [vmem:[%s1 + $0x210] sm:$0xf]
        %v369 = vld [vmem:[%s1 + $0x214] sm:$0xf]
        %v370 = vld [vmem:[%s1 + $0x218] sm:$0xf]
        %v371 = vld [vmem:[%s1 + $0x21c] sm:$0xf]
        %v372 = vld [vmem:[%s1 + $0x220] sm:$0xf]
        %v373 = vld [vmem:[%s1 + $0x224] sm:$0xf]
        %v374 = vld [vmem:[%s1 + $0x228] sm:$0xf]
        %v375 = vld [vmem:[%s1 + $0x22c] sm:$0xf]
        %v376 = vld [vmem:[%s1 + $0x230] sm:$0xf]
        %v377 = vld [vmem:[%s1 + $0x234] sm:$0xf]
        %v378 = vld [vmem:[%s1 + $0x238] sm:$0xf]
        %v379 = vld [vmem:[%s1 + $0x23c] sm:$0xf]
        %v380 = vld [vmem:[%s1 + $0x240] sm:$0xf]
        %v381 = vld [vmem:[%s1 + $0x244] sm:$0xf]
        %v382 = vld [vmem:[%s1 + $0x248] sm:$0xf]
        %v383 = vld [vmem:[%s1 + $0x24c] sm:$0xf]
        %v384 = vld [vmem:[%s1 + $0x250] sm:$0xf]
        %v385 = vld [vmem:[%s1 + $0x254] sm:$0xf]
        %v386 = vld [vmem:[%s1 + $0x258] sm:$0xf]
        %v387 = vld [vmem:[%s1 + $0x25c] sm:$0xf]
        %v388 = vld [vmem:[%s1 + $0x260] sm:$0xf]
        %v389 = vld [vmem:[%s1 + $0x264] sm:$0xf]
        %v390 = vld [vmem:[%s1 + $0x268] sm:$0xf]
        %v391 = vld [vmem:[%s1 + $0x26c] sm:$0xf]
        %v392 = vld [vmem:[%s1 + $0x270] sm:$0xf]
        %v393 = vld [vmem:[%s1 + $0x274] sm:$0xf]
        %v394 = vld [vmem:[%s1 + $0x278] sm:$0xf]
        %v395 = vld [vmem:[%s1 + $0x27c] sm:$0xf]
        %v396 = vld [vmem:[%s1 + $0x280] sm:$0xf]
        %v397 = vld [vmem:[%s1 + $0x284] sm:$0xf]
        %v398 = vld [vmem:[%s1 + $0x288] sm:$0xf]
        %v399 = vld [vmem:[%s1 + $0x28c] sm:$0xf]
        %v400 = vld [vmem:[%s1 + $0x290] sm:$0xf]
        %v401 = vld [vmem:[%s1 + $0x294] sm:$0xf]
        %v402 = vld [vmem:[%s1 + $0x298] sm:$0xf]
        %v403 = vld [vmem:[%s1 + $0x29c] sm:$0xf]
        %v404 = vld [vmem:[%s1 + $0x2a0] sm:$0xf]
        %v405 = vld [vmem:[%s1 + $0x2a4] sm:$0xf]
        %v406 = vld [vmem:[%s1 + $0x2a8] sm:$0xf]
        %v407 = vld [vmem:[%s1 + $0x2ac] sm:$0xf]
        %v408 = vld [vmem:[%s1 + $0x2b0] sm:$0xf]
        %v409 = vld [vmem:[%s1 + $0x2b4] sm:$0xf]
        %v410 = vld [vmem:[%s1 + $0x2b8] sm:$0xf]
        %v411 = vld [vmem:[%s1 + $0x2bc] sm:$0xf]
        %v412 = vld [vmem:[%s1 + $0x2c0] sm:$0xf]
        %v413 = vld [vmem:[%s1 + $0x2c4] sm:$0xf]
        %v414 = vld [vmem:[%s1 + $0x2c8] sm:$0xf]
        %v415 = vld [vmem:[%s1 + $0x2cc] sm:$0xf]
        %v416 = vld [vmem:[%s1 + $0x2d0] sm:$0xf]
        %v417 = vld [vmem:[%s1 + $0x2d4] sm:$0xf]
        %v418 = vld [vmem:[%s1 + $0x2d8] sm:$0xf]
        %v419 = vld [vmem:[%s1 + $0x2dc] sm:$0xf]
        %v420 = vld [vmem:[%s1 + $0x2e0] sm:$0xf]
        %v421 = vld [vmem:[%s1 + $0x2e4] sm:$0xf]
        %v422 = vld [vmem:[%s1 + $0x2e8] sm:$0xf]
        %v423 = vld [vmem:[%s1 + $0x2ec] sm:$0xf]
        %v424 = vld [vmem:[%s1 + $0x2f0] sm:$0xf]
        %v425 = vld [vmem:[%s1 + $0x2f4] sm:$0xf]
        %v426 = vld [vmem:[%s1 + $0x2f8] sm:$0xf]
        %v427 = vld [vmem:[%s1 + $0x2fc] sm:$0xf]
        %v428 = vld [vmem:[%s1 + $0x300] sm:$0xf]
        %v429 = vld [vmem:[%s1 + $0x304] sm:$0xf]
        %v430 = vld [vmem:[%s1 + $0x308] sm:$0xf]
        %v431 = vld [vmem:[%s1 + $0x30c] sm:$0xf]
        %v432 = vld [vmem:[%s1 + $0x310] sm:$0xf]
        %v433 = vld [vmem:[%s1 + $0x314] sm:$0xf]
        %v434 = vld [vmem:[%s1 + $0x318] sm:$0xf]
        %v435 = vld [vmem:[%s1 + $0x31c] sm:$0xf]
        %v436 = vld [vmem:[%s1 + $0x320] sm:$0xf]
        %v437 = vld [vmem:[%s1 + $0x324] sm:$0xf]
        %v438 = vld [vmem:[%s1 + $0x328] sm:$0xf]
        %v439 = vld [vmem:[%s1 + $0x32c] sm:$0xf]
        %v440 = vld [vmem:[%s1 + $0x330] sm:$0xf]
        %v441 = vld [vmem:[%s1 + $0x334] sm:$0xf]
        %v442 = vld [vmem:[%s1 + $0x338] sm:$0xf]
        %v443 = vld [vmem:[%s1 + $0x33c] sm:$0xf]
        %v444 = vld [vmem:[%s1 + $0x340] sm:$0xf]
        %v445 = vld [vmem:[%s1 + $0x344] sm:$0xf]
        %v446 = vld [vmem:[%s1 + $0x348] sm:$0xf]
        %v447 = vld [vmem:[%s1 + $0x34c] sm:$0xf]
        %v448 = vld [vmem:[%s1 + $0x350] sm:$0xf]
        %v449 = vld [vmem:[%s1 + $0x354] sm:$0xf]
        %v450 = vld [vmem:[%s1 + $0x358] sm:$0xf]
        %v451 = vld [vmem:[%s1 + $0x35c] sm:$0xf]
        %v452 = vld [vmem:[%s1 + $0x360] sm:$0xf]
        %v453 = vld [vmem:[%s1 + $0x364] sm:$0xf]
        %v454 = vld [vmem:[%s1 + $0x368] sm:$0xf]
        %v455 = vld [vmem:[%s1 + $0x36c] sm:$0xf]
        %v456 = vld [vmem:[%s1 + $0x370] sm:$0xf]
        %v457 = vld [vmem:[%s1 + $0x374] sm:$0xf]
        %v458 = vld [vmem:[%s1 + $0x378] sm:$0xf]
        %v459 = vld [vmem:[%s1 + $0x37c] sm:$0xf]
        %v460 = vld [vmem:[%s1 + $0x380] sm:$0xf]
        %v461 = vld [vmem:[%s1 + $0x384] sm:$0xf]
        %v462 = vld [vmem:[%s1 + $0x388] sm:$0xf]
        %v463 = vld [vmem:[%s1 + $0x38c] sm:$0xf]
        %v464 = vld [vmem:[%s1 + $0x390] sm:$0xf]
        %v465 = vld [vmem:[%s1 + $0x394] sm:$0xf]
        %v466 = vld [vmem:[%s1 + $0x398] sm:$0xf]
        %v467 = vld [vmem:[%s1 + $0x39c] sm:$0xf]
        %v468 = vld [vmem:[%s1 + $0x3a0] sm:$0xf]
        %v469 = vld [vmem:[%s1 + $0x3a4] sm:$0xf]
        %v470 = vld [vmem:[%s1 + $0x3a8] sm:$0xf]
        %v471 = vld [vmem:[%s1 + $0x3ac] sm:$0xf]
        %v472 = vld [vmem:[%s1 + $0x3b0] sm:$0xf]
        %v473 = vld [vmem:[%s1 + $0x3b4] sm:$0xf]
        %v474 = vld [vmem:[%s1 + $0x3b8] sm:$0xf]
        %v475 = vld [vmem:[%s1 + $0x3bc] sm:$0xf]
        %v476 = vld [vmem:[%s1 + $0x3c0] sm:$0xf]
        %v477 = vld [vmem:[%s1 + $0x3c4] sm:$0xf]
        %v478 = vld [vmem:[%s1 + $0x3c8] sm:$0xf]
        %v479 = vld [vmem:[%s1 + $0x3cc] sm:$0xf]
        %v480 = vld [vmem:[%s1 + $0x3d0] sm:$0xf]
        %v481 = vld [vmem:[%s1 + $0x3d4] sm:$0xf]
        %v482 = vld [vmem:[%s1 + $0x3d8] sm:$0xf]
        %v483 = vld [vmem:[%s1 + $0x3dc] sm:$0xf]
        %v484 = vld [vmem:[%s1 + $0x3e0] sm:$0xf]
        %v485 = vld [vmem:[%s1 + $0x3e4] sm:$0xf]
        %v486 = vld [vmem:[%s1 + $0x3e8] sm:$0xf]
        %v487 = vld [vmem:[%s1 + $0x3ec] sm:$0xf]
        %v488 = vld [vmem:[%s1 + $0x3f0] sm:$0xf]
        %v489 = vld [vmem:[%s1 + $0x3f4] sm:$0xf]
        %v490 = vld [vmem:[%s1 + $0x3f8] sm:$0xf]
        %v491 = vld [vmem:[%s1 + $0x3fc] sm:$0xf]
        %v492 = vld [vmem:[%s1 + $0x400] sm:$0xf]
        %v493 = vld [vmem:[%s1 + $0x404] sm:$0xf]
        %v494 = vld [vmem:[%s1 + $0x408] sm:$0xf]
        %v495 = vld [vmem:[%s1 + $0x40c] sm:$0xf]
        %v496 = vld [vmem:[%s1 + $0x410] sm:$0xf]
        %v497 = vld [vmem:[%s1 + $0x414] sm:$0xf]
        %v498 = vld [vmem:[%s1 + $0x418] sm:$0xf]
        %v499 = vld [vmem:[%s1 + $0x41c] sm:$0xf]
        %v500 = vld [vmem:[%s1 + $0x420] sm:$0xf]
        %v501 = vld [vmem:[%s1 + $0x424] sm:$0xf]
        %v502 = vld [vmem:[%s1 + $0x428] sm:$0xf]
        %v503 = vld [vmem:[%s1 + $0x42c] sm:$0xf]
        %v504 = vld [vmem:[%s1 + $0x430] sm:$0xf]
        %v505 = vld [vmem:[%s1 + $0x434] sm:$0xf]
        %v506 = vld [vmem:[%s1 + $0x438] sm:$0xf]
        %v507 = vld [vmem:[%s1 + $0x43c] sm:$0xf]
        %v508 = vld [vmem:[%s1 + $0x440] sm:$0xf]
        %v509 = vld [vmem:[%s1 + $0x444] sm:$0xf]
        %v510 = vld [vmem:[%s1 + $0x448] sm:$0xf]
        %v511 = vld [vmem:[%s1 + $0x44c] sm:$0xf]
        %v512 = vld [vmem:[%s1 + $0x450] sm:$0xf]
        %v513 = vld [vmem:[%s1 + $0x454] sm:$0xf]
        %v514 = vld [vmem:[%s1 + $0x458] sm:$0xf]
        %v515 = vld [vmem:[%s1 + $0x45c] sm:$0xf]
        %v516 = vld [vmem:[%s1 + $0x460] sm:$0xf]
        %v517 = vld [vmem:[%s1 + $0x464] sm:$0xf]
        %v518 = vld [vmem:[%s1 + $0x468] sm:$0xf]
        %v519 = vld [vmem:[%s1 + $0x46c] sm:$0xf]
        %v520 = vld [vmem:[%s1 + $0x470] sm:$0xf]
        %v521 = vld [vmem:[%s1 + $0x474] sm:$0xf]
        %v522 = vld [vmem:[%s1 + $0x478] sm:$0xf]
        %v523 = vld [vmem:[%s1 + $0x47c] sm:$0xf]
        %v524 = vld [vmem:[%s1 + $0x480] sm:$0xf]
        %v525 = vld [vmem:[%s1 + $0x484] sm:$0xf]
        %v526 = vld [vmem:[%s1 + $0x488] sm:$0xf]
        %v527 = vld [vmem:[%s1 + $0x48c] sm:$0xf]
        %v528 = vld [vmem:[%s1 + $0x490] sm:$0xf]
        %v529 = vld [vmem:[%s1 + $0x494] sm:$0xf]
        %v530 = vld [vmem:[%s1 + $0x498] sm:$0xf]
        %v531 = vld [vmem:[%s1 + $0x49c] sm:$0xf]
        %v532 = vld [vmem:[%s1 + $0x4a0] sm:$0xf]
        %v533 = vld [vmem:[%s1 + $0x4a4] sm:$0xf]
        %v534 = vld [vmem:[%s1 + $0x4a8] sm:$0xf]
        %v535 = vld [vmem:[%s1 + $0x4ac] sm:$0xf]
        %v536 = vld [vmem:[%s1 + $0x4b0] sm:$0xf]
        %v537 = vld [vmem:[%s1 + $0x4b4] sm:$0xf]
        %v538 = vld [vmem:[%s1 + $0x4b8] sm:$0xf]
        %v539 = vld [vmem:[%s1 + $0x4bc] sm:$0xf]
        %v540 = vld [vmem:[%s1 + $0x4c0] sm:$0xf]
        %v541 = vld [vmem:[%s1 + $0x4c4] sm:$0xf]
        %v542 = vld [vmem:[%s1 + $0x4c8] sm:$0xf]
        %v543 = vld [vmem:[%s1 + $0x4cc] sm:$0xf]
        %v544 = vld [vmem:[%s1 + $0x4d0] sm:$0xf]
        %v545 = vld [vmem:[%s1 + $0x4d4] sm:$0xf]
        %v546 = vld [vmem:[%s1 + $0x4d8] sm:$0xf]
        %v547 = vld [vmem:[%s1 + $0x4dc] sm:$0xf]
        %v548 = vld [vmem:[%s1 + $0x4e0] sm:$0xf]
        %v549 = vld [vmem:[%s1 + $0x4e4] sm:$0xf]
        %v550 = vld [vmem:[%s1 + $0x4e8] sm:$0xf]
        %v551 = vld [vmem:[%s1 + $0x4ec] sm:$0xf]
        %v552 = vld [vmem:[%s1 + $0x4f0] sm:$0xf]
        %v553 = vld [vmem:[%s1 + $0x4f4] sm:$0xf]
        %v554 = vld [vmem:[%s1 + $0x4f8] sm:$0xf]
        %v555 = vld [vmem:[%s1 + $0x4fc] sm:$0xf]
        %v556 = vld [vmem:[%s1 + $0x500] sm:$0xf]
        %v557 = vld [vmem:[%s1 + $0x504] sm:$0xf]
        %v558 = vld [vmem:[%s1 + $0x508] sm:$0xf]
        %v559 = vld [vmem:[%s1 + $0x50c] sm:$0xf]
        %v560 = vld [vmem:[%s1 + $0x510] sm:$0xf]
        %v561 = vld [vmem:[%s1 + $0x514] sm:$0xf]
        %v562 = vld [vmem:[%s1 + $0x518] sm:$0xf]
        %v563 = vld [vmem:[%s1 + $0x51c] sm:$0xf]
        %v564 = vld [vmem:[%s1 + $0x520] sm:$0xf]
        %v565 = vld [vmem:[%s1 + $0x524] sm:$0xf]
        %v566 = vld [vmem:[%s1 + $0x528] sm:$0xf]
        %v567 = vld [vmem:[%s1 + $0x52c] sm:$0xf]
        %v568 = vld [vmem:[%s1 + $0x530] sm:$0xf]
        %v569 = vld [vmem:[%s1 + $0x534] sm:$0xf]
        %v570 = vld [vmem:[%s1 + $0x538] sm:$0xf]
        %v571 = vld [vmem:[%s1 + $0x53c] sm:$0xf]
        %v572 = vld [vmem:[%s1 + $0x540] sm:$0xf]
        %v573 = vld [vmem:[%s1 + $0x544] sm:$0xf]
        %v574 = vld [vmem:[%s1 + $0x548] sm:$0xf]
        %v575 = vld [vmem:[%s1 + $0x54c] sm:$0xf]
        %v576 = vld [vmem:[%s1 + $0x550] sm:$0xf]
        %v577 = vld [vmem:[%s1 + $0x554] sm:$0xf]
        %v578 = vld [vmem:[%s1 + $0x558] sm:$0xf]
        %v579 = vld [vmem:[%s1 + $0x55c] sm:$0xf]
        %v580 = vld [vmem:[%s1 + $0x560] sm:$0xf]
        %v581 = vld [vmem:[%s1 + $0x564] sm:$0xf]
        %v582 = vld [vmem:[%s1 + $0x568] sm:$0xf]
        %v583 = vld [vmem:[%s1 + $0x56c] sm:$0xf]
        %v584 = vld [vmem:[%s1 + $0x570] sm:$0xf]
        %v585 = vld [vmem:[%s1 + $0x574] sm:$0xf]
        %v586 = vld [vmem:[%s1 + $0x578] sm:$0xf]
        %v587 = vld [vmem:[%s1 + $0x57c] sm:$0xf]
        %v588 = vld [vmem:[%s1 + $0x580] sm:$0xf]
        %v589 = vld [vmem:[%s1 + $0x584] sm:$0xf]
        %v590 = vld [vmem:[%s1 + $0x588] sm:$0xf]
        %v591 = vld [vmem:[%s1 + $0x58c] sm:$0xf]
        %v592 = vld [vmem:[%s1 + $0x590] sm:$0xf]
        %v593 = vld [vmem:[%s1 + $0x594] sm:$0xf]
        %v594 = vld [vmem:[%s1 + $0x598] sm:$0xf]
        %v595 = vld [vmem:[%s1 + $0x59c] sm:$0xf]
        %v596 = vld [vmem:[%s1 + $0x5a0] sm:$0xf]
        %v597 = vld [vmem:[%s1 + $0x5a4] sm:$0xf]
        %v598 = vld [vmem:[%s1 + $0x5a8] sm:$0xf]
        %v599 = vld [vmem:[%s1 + $0x5ac] sm:$0xf]
        %v600 = vld [vmem:[%s1 + $0x5b0] sm:$0xf]
        %v601 = vld [vmem:[%s1 + $0x5b4] sm:$0xf]
        %v602 = vld [vmem:[%s1 + $0x5b8] sm:$0xf]
        %v603 = vld [vmem:[%s1 + $0x5bc] sm:$0xf]
        %v604 = vld [vmem:[%s1 + $0x5c0] sm:$0xf]
        %v605 = vld [vmem:[%s1 + $0x5c4] sm:$0xf]
        %v606 = vld [vmem:[%s1 + $0x5c8] sm:$0xf]
        %v607 = vld [vmem:[%s1 + $0x5cc] sm:$0xf]
        %v608 = vld [vmem:[%s1 + $0x5d0] sm:$0xf]
        %v609 = vld [vmem:[%s1 + $0x5d4] sm:$0xf]
        %v610 = vld [vmem:[%s1 + $0x5d8] sm:$0xf]
        %v611 = vld [vmem:[%s1 + $0x5dc] sm:$0xf]
        %v612 = vld [vmem:[%s1 + $0x5e0] sm:$0xf]
        %v613 = vld [vmem:[%s1 + $0x5e4] sm:$0xf]
        %v614 = vld [vmem:[%s1 + $0x5e8] sm:$0xf]
        %v615 = vld [vmem:[%s1 + $0x5ec] sm:$0xf]
        %v616 = vld [vmem:[%s1 + $0x5f0] sm:$0xf]
        %v617 = vld [vmem:[%s1 + $0x5f4] sm:$0xf]
        %v618 = vld [vmem:[%s1 + $0x5f8] sm:$0xf]
        %v619 = vld [vmem:[%s1 + $0x5fc] sm:$0xf]
        %v620 = vld [vmem:[%s2] sm:$0x1]
        %v622 = vlaneseq
        %v623 = vshrl.u32 %v622, 7
        %v624 = vsub.s32 0, %v623
        %v625 = vrot.slane %v620, %v624
        %v639 = vunpack.c.l.b16 %v224
        %v640 = vunpack.c.h.b16 %v224
        %v641 = vunpack.c.l.b16 %v225
        %v642 = vunpack.c.h.b16 %v225
        %v643 = vunpack.c.l.b16 %v226
        %v644 = vunpack.c.h.b16 %v226
        %v645 = vunpack.c.l.b16 %v227
        %v646 = vunpack.c.h.b16 %v227
        %v647 = vunpack.c.l.b16 %v228
        %v648 = vunpack.c.h.b16 %v228
        %v649 = vunpack.c.l.b16 %v229
        %v650 = vunpack.c.h.b16 %v229
        %v651 = vunpack.c.l.b16 %v230
        %v652 = vunpack.c.h.b16 %v230
        %v653 = vunpack.c.l.b16 %v231
        %v654 = vunpack.c.h.b16 %v231
        %v655 = vunpack.c.l.b16 %v232
        %v656 = vunpack.c.h.b16 %v232
        %v657 = vunpack.c.l.b16 %v233
        %v658 = vunpack.c.h.b16 %v233
        %v659 = vunpack.c.l.b16 %v234
        %v660 = vunpack.c.h.b16 %v234
        %v661 = vunpack.c.l.b16 %v235
        %v662 = vunpack.c.h.b16 %v235
        %v663 = vpack.c.b16 %v639, %v639
        %v664 = vpack.c.b16 %v640, %v640
        %v665 = vpack.c.b16 %v641, %v641
        %v666 = vpack.c.b16 %v642, %v642
        %v667 = vpack.c.b16 %v643, %v643
        %v668 = vpack.c.b16 %v644, %v644
        %v669 = vpack.c.b16 %v645, %v645
        %v670 = vpack.c.b16 %v646, %v646
        %v671 = vpack.c.b16 %v647, %v647
        %v672 = vpack.c.b16 %v648, %v648
        %v673 = vpack.c.b16 %v649, %v649
        %v674 = vpack.c.b16 %v650, %v650
        %v675 = vpack.c.b16 %v651, %v651
        %v676 = vpack.c.b16 %v652, %v652
        %v677 = vpack.c.b16 %v653, %v653
        %v678 = vpack.c.b16 %v654, %v654
        %v679 = vpack.c.b16 %v655, %v655
        %v680 = vpack.c.b16 %v656, %v656
        %v681 = vpack.c.b16 %v657, %v657
        %v682 = vpack.c.b16 %v658, %v658
        %v683 = vpack.c.b16 %v659, %v659
        %v684 = vpack.c.b16 %v660, %v660
        %v685 = vpack.c.b16 %v661, %v661
        %v686 = vpack.c.b16 %v662, %v662
        %v1095 = vunpack.c.l.b16 %v236
        %v1096 = vunpack.c.l.b16 %v237
        %v1097 = vunpack.c.l.b16 %v238
        %v1098 = vunpack.c.l.b16 %v239
        %v1099 = vunpack.c.l.b16 %v240
        %v1100 = vunpack.c.l.b16 %v241
        %v1101 = vunpack.c.l.b16 %v242
        %v1102 = vunpack.c.l.b16 %v243
        %v1103 = vunpack.c.l.b16 %v244
        %v1104 = vunpack.c.l.b16 %v245
        %v1105 = vunpack.c.l.b16 %v246
        %v1106 = vunpack.c.l.b16 %v247
        %v1107 = vunpack.c.l.b16 %v248
        %v1108 = vunpack.c.l.b16 %v249
        %v1109 = vunpack.c.l.b16 %v250
        %v1110 = vunpack.c.l.b16 %v251
        %v1111 = vunpack.c.l.b16 %v252
        %v1112 = vunpack.c.l.b16 %v253
        %v1113 = vunpack.c.l.b16 %v254
        %v1114 = vunpack.c.l.b16 %v255
        %v1115 = vunpack.c.l.b16 %v256
        %v1116 = vunpack.c.l.b16 %v257
        %v1117 = vunpack.c.l.b16 %v258
        %v1118 = vunpack.c.l.b16 %v259
        %v1119 = vunpack.c.l.b16 %v260
        %v1120 = vunpack.c.l.b16 %v261
        %v1121 = vunpack.c.l.b16 %v262
        %v1122 = vunpack.c.l.b16 %v263
        %v1123 = vunpack.c.l.b16 %v264
        %v1124 = vunpack.c.l.b16 %v265
        %v1125 = vunpack.c.l.b16 %v266
        %v1126 = vunpack.c.l.b16 %v267
        %v1127 = vunpack.c.l.b16 %v268
        %v1128 = vunpack.c.l.b16 %v269
        %v1129 = vunpack.c.l.b16 %v270
        %v1130 = vunpack.c.l.b16 %v271
        %v1131 = vunpack.c.l.b16 %v272
        %v1132 = vunpack.c.l.b16 %v273
        %v1133 = vunpack.c.l.b16 %v274
        %v1134 = vunpack.c.l.b16 %v275
        %v1135 = vunpack.c.l.b16 %v276
        %v1136 = vunpack.c.l.b16 %v277
        %v1137 = vunpack.c.l.b16 %v278
        %v1138 = vunpack.c.l.b16 %v279
        %v1139 = vunpack.c.l.b16 %v280
        %v1140 = vunpack.c.l.b16 %v281
        %v1141 = vunpack.c.l.b16 %v282
        %v1142 = vunpack.c.l.b16 %v283
        %v1143 = vunpack.c.l.b16 %v284
        %v1144 = vunpack.c.l.b16 %v285
        %v1145 = vunpack.c.l.b16 %v286
        %v1146 = vunpack.c.l.b16 %v287
        %v1147 = vunpack.c.l.b16 %v288
        %v1148 = vunpack.c.l.b16 %v289
        %v1149 = vunpack.c.l.b16 %v290
        %v1150 = vunpack.c.l.b16 %v291
        %v1151 = vunpack.c.l.b16 %v292
        %v1152 = vunpack.c.l.b16 %v293
        %v1153 = vunpack.c.l.b16 %v294
        %v1154 = vunpack.c.l.b16 %v295
        %v1155 = vunpack.c.l.b16 %v296
        %v1156 = vunpack.c.l.b16 %v297
        %v1157 = vunpack.c.l.b16 %v298
        %v1158 = vunpack.c.l.b16 %v299
        %v1159 = vunpack.c.l.b16 %v300
        %v1160 = vunpack.c.l.b16 %v301
        %v1161 = vunpack.c.l.b16 %v302
        %v1162 = vunpack.c.l.b16 %v303
        %v1163 = vunpack.c.l.b16 %v304
        %v1164 = vunpack.c.l.b16 %v305
        %v1165 = vunpack.c.l.b16 %v306
        %v1166 = vunpack.c.l.b16 %v307
        %v1167 = vunpack.c.l.b16 %v308
        %v1168 = vunpack.c.l.b16 %v309
        %v1169 = vunpack.c.l.b16 %v310
        %v1170 = vunpack.c.l.b16 %v311
        %v1171 = vunpack.c.l.b16 %v312
        %v1172 = vunpack.c.l.b16 %v313
        %v1173 = vunpack.c.l.b16 %v314
        %v1174 = vunpack.c.l.b16 %v315
        %v1175 = vunpack.c.l.b16 %v316
        %v1176 = vunpack.c.l.b16 %v317
        %v1177 = vunpack.c.l.b16 %v318
        %v1178 = vunpack.c.l.b16 %v319
        %v1179 = vunpack.c.l.b16 %v320
        %v1180 = vunpack.c.l.b16 %v321
        %v1181 = vunpack.c.l.b16 %v322
        %v1182 = vunpack.c.l.b16 %v323
        %v1183 = vunpack.c.l.b16 %v324
        %v1184 = vunpack.c.l.b16 %v325
        %v1185 = vunpack.c.l.b16 %v326
        %v1186 = vunpack.c.l.b16 %v327
        %v1187 = vunpack.c.l.b16 %v328
        %v1188 = vunpack.c.l.b16 %v329
        %v1189 = vunpack.c.l.b16 %v330
        %v1190 = vunpack.c.l.b16 %v331
        %v1191 = vunpack.c.l.b16 %v332
        %v1192 = vunpack.c.l.b16 %v333
        %v1193 = vunpack.c.l.b16 %v334
        %v1194 = vunpack.c.l.b16 %v335
        %v1195 = vunpack.c.l.b16 %v336
        %v1196 = vunpack.c.l.b16 %v337
        %v1197 = vunpack.c.l.b16 %v338
        %v1198 = vunpack.c.l.b16 %v339
        %v1199 = vunpack.c.l.b16 %v340
        %v1200 = vunpack.c.l.b16 %v341
        %v1201 = vunpack.c.l.b16 %v342
        %v1202 = vunpack.c.l.b16 %v343
        %v1203 = vunpack.c.l.b16 %v344
        %v1204 = vunpack.c.l.b16 %v345
        %v1205 = vunpack.c.l.b16 %v346
        %v1206 = vunpack.c.l.b16 %v347
        %v1207 = vunpack.c.l.b16 %v348
        %v1208 = vunpack.c.l.b16 %v349
        %v1209 = vunpack.c.l.b16 %v350
        %v1210 = vunpack.c.l.b16 %v351
        %v1211 = vunpack.c.l.b16 %v352
        %v1212 = vunpack.c.l.b16 %v353
        %v1213 = vunpack.c.l.b16 %v354
        %v1214 = vunpack.c.l.b16 %v355
        %v1215 = vunpack.c.l.b16 %v356
        %v1216 = vunpack.c.l.b16 %v357
        %v1217 = vunpack.c.l.b16 %v358
        %v1218 = vunpack.c.l.b16 %v359
        %v1219 = vunpack.c.l.b16 %v360
        %v1220 = vunpack.c.l.b16 %v361
        %v1221 = vunpack.c.l.b16 %v362
        %v1222 = vunpack.c.l.b16 %v363
        %v1223 = vunpack.c.l.b16 %v364
        %v1224 = vunpack.c.l.b16 %v365
        %v1225 = vunpack.c.l.b16 %v366
        %v1226 = vunpack.c.l.b16 %v367
        %v1227 = vunpack.c.l.b16 %v368
        %v1228 = vunpack.c.l.b16 %v369
        %v1229 = vunpack.c.l.b16 %v370
        %v1230 = vunpack.c.l.b16 %v371
        %v1231 = vunpack.c.l.b16 %v372
        %v1232 = vunpack.c.l.b16 %v373
        %v1233 = vunpack.c.l.b16 %v374
        %v1234 = vunpack.c.l.b16 %v375
        %v1235 = vunpack.c.l.b16 %v376
        %v1236 = vunpack.c.l.b16 %v377
        %v1237 = vunpack.c.l.b16 %v378
        %v1238 = vunpack.c.l.b16 %v379
        %v1239 = vunpack.c.l.b16 %v380
        %v1240 = vunpack.c.l.b16 %v381
        %v1241 = vunpack.c.l.b16 %v382
        %v1242 = vunpack.c.l.b16 %v383
        %v1243 = vunpack.c.l.b16 %v384
        %v1244 = vunpack.c.l.b16 %v385
        %v1245 = vunpack.c.l.b16 %v386
        %v1246 = vunpack.c.l.b16 %v387
        %v1247 = vunpack.c.l.b16 %v388
        %v1248 = vunpack.c.l.b16 %v389
        %v1249 = vunpack.c.l.b16 %v390
        %v1250 = vunpack.c.l.b16 %v391
        %v1251 = vunpack.c.l.b16 %v392
        %v1252 = vunpack.c.l.b16 %v393
        %v1253 = vunpack.c.l.b16 %v394
        %v1254 = vunpack.c.l.b16 %v395
        %v1255 = vunpack.c.l.b16 %v396
        %v1256 = vunpack.c.l.b16 %v397
        %v1257 = vunpack.c.l.b16 %v398
        %v1258 = vunpack.c.l.b16 %v399
        %v1259 = vunpack.c.l.b16 %v400
        %v1260 = vunpack.c.l.b16 %v401
        %v1261 = vunpack.c.l.b16 %v402
        %v1262 = vunpack.c.l.b16 %v403
        %v1263 = vunpack.c.l.b16 %v404
        %v1264 = vunpack.c.l.b16 %v405
        %v1265 = vunpack.c.l.b16 %v406
        %v1266 = vunpack.c.l.b16 %v407
        %v1267 = vunpack.c.l.b16 %v408
        %v1268 = vunpack.c.l.b16 %v409
        %v1269 = vunpack.c.l.b16 %v410
        %v1270 = vunpack.c.l.b16 %v411
        %v1271 = vunpack.c.l.b16 %v412
        %v1272 = vunpack.c.l.b16 %v413
        %v1273 = vunpack.c.l.b16 %v414
        %v1274 = vunpack.c.l.b16 %v415
        %v1275 = vunpack.c.l.b16 %v416
        %v1276 = vunpack.c.l.b16 %v417
        %v1277 = vunpack.c.l.b16 %v418
        %v1278 = vunpack.c.l.b16 %v419
        %v1279 = vunpack.c.l.b16 %v420
        %v1280 = vunpack.c.l.b16 %v421
        %v1281 = vunpack.c.l.b16 %v422
        %v1282 = vunpack.c.l.b16 %v423
        %v1283 = vunpack.c.l.b16 %v424
        %v1284 = vunpack.c.l.b16 %v425
        %v1285 = vunpack.c.l.b16 %v426
        %v1286 = vunpack.c.l.b16 %v427
        %v1287 = vunpack.c.l.b16 %v428
        %v1288 = vunpack.c.l.b16 %v429
        %v1289 = vunpack.c.l.b16 %v430
        %v1290 = vunpack.c.l.b16 %v431
        %v1291 = vunpack.c.l.b16 %v432
        %v1292 = vunpack.c.l.b16 %v433
        %v1293 = vunpack.c.l.b16 %v434
        %v1294 = vunpack.c.l.b16 %v435
        %v1295 = vunpack.c.l.b16 %v436
        %v1296 = vunpack.c.l.b16 %v437
        %v1297 = vunpack.c.l.b16 %v438
        %v1298 = vunpack.c.l.b16 %v439
        %v1299 = vunpack.c.l.b16 %v440
        %v1300 = vunpack.c.l.b16 %v441
        %v1301 = vunpack.c.l.b16 %v442
        %v1302 = vunpack.c.l.b16 %v443
        %v1303 = vunpack.c.l.b16 %v444
        %v1304 = vunpack.c.l.b16 %v445
        %v1305 = vunpack.c.l.b16 %v446
        %v1306 = vunpack.c.l.b16 %v447
        %v1307 = vunpack.c.l.b16 %v448
        %v1308 = vunpack.c.l.b16 %v449
        %v1309 = vunpack.c.l.b16 %v450
        %v1310 = vunpack.c.l.b16 %v451
        %v1311 = vunpack.c.l.b16 %v452
        %v1312 = vunpack.c.l.b16 %v453
        %v1313 = vunpack.c.l.b16 %v454
        %v1314 = vunpack.c.l.b16 %v455
        %v1315 = vunpack.c.l.b16 %v456
        %v1316 = vunpack.c.l.b16 %v457
        %v1317 = vunpack.c.l.b16 %v458
        %v1318 = vunpack.c.l.b16 %v459
        %v1319 = vunpack.c.l.b16 %v460
        %v1320 = vunpack.c.l.b16 %v461
        %v1321 = vunpack.c.l.b16 %v462
        %v1322 = vunpack.c.l.b16 %v463
        %v1323 = vunpack.c.l.b16 %v464
        %v1324 = vunpack.c.l.b16 %v465
        %v1325 = vunpack.c.l.b16 %v466
        %v1326 = vunpack.c.l.b16 %v467
        %v1327 = vunpack.c.l.b16 %v468
        %v1328 = vunpack.c.l.b16 %v469
        %v1329 = vunpack.c.l.b16 %v470
        %v1330 = vunpack.c.l.b16 %v471
        %v1331 = vunpack.c.l.b16 %v472
        %v1332 = vunpack.c.l.b16 %v473
        %v1333 = vunpack.c.l.b16 %v474
        %v1334 = vunpack.c.l.b16 %v475
        %v1335 = vunpack.c.l.b16 %v476
        %v1336 = vunpack.c.l.b16 %v477
        %v1337 = vunpack.c.l.b16 %v478
        %v1338 = vunpack.c.l.b16 %v479
        %v1339 = vunpack.c.l.b16 %v480
        %v1340 = vunpack.c.l.b16 %v481
        %v1341 = vunpack.c.l.b16 %v482
        %v1342 = vunpack.c.l.b16 %v483
        %v1343 = vunpack.c.l.b16 %v484
        %v1344 = vunpack.c.l.b16 %v485
        %v1345 = vunpack.c.l.b16 %v486
        %v1346 = vunpack.c.l.b16 %v487
        %v1347 = vunpack.c.l.b16 %v488
        %v1348 = vunpack.c.l.b16 %v489
        %v1349 = vunpack.c.l.b16 %v490
        %v1350 = vunpack.c.l.b16 %v491
        %v1351 = vunpack.c.l.b16 %v492
        %v1352 = vunpack.c.l.b16 %v493
        %v1353 = vunpack.c.l.b16 %v494
        %v1354 = vunpack.c.l.b16 %v495
        %v1355 = vunpack.c.l.b16 %v496
        %v1356 = vunpack.c.l.b16 %v497
        %v1357 = vunpack.c.l.b16 %v498
        %v1358 = vunpack.c.l.b16 %v499
        %v1359 = vunpack.c.l.b16 %v500
        %v1360 = vunpack.c.l.b16 %v501
        %v1361 = vunpack.c.l.b16 %v502
        %v1362 = vunpack.c.l.b16 %v503
        %v1363 = vunpack.c.l.b16 %v504
        %v1364 = vunpack.c.l.b16 %v505
        %v1365 = vunpack.c.l.b16 %v506
        %v1366 = vunpack.c.l.b16 %v507
        %v1367 = vunpack.c.l.b16 %v508
        %v1368 = vunpack.c.l.b16 %v509
        %v1369 = vunpack.c.l.b16 %v510
        %v1370 = vunpack.c.l.b16 %v511
        %v1371 = vunpack.c.l.b16 %v512
        %v1372 = vunpack.c.l.b16 %v513
        %v1373 = vunpack.c.l.b16 %v514
        %v1374 = vunpack.c.l.b16 %v515
        %v1375 = vunpack.c.l.b16 %v516
        %v1376 = vunpack.c.l.b16 %v517
        %v1377 = vunpack.c.l.b16 %v518
        %v1378 = vunpack.c.l.b16 %v519
        %v1379 = vunpack.c.l.b16 %v520
        %v1380 = vunpack.c.l.b16 %v521
        %v1381 = vunpack.c.l.b16 %v522
        %v1382 = vunpack.c.l.b16 %v523
        %v1383 = vunpack.c.l.b16 %v524
        %v1384 = vunpack.c.l.b16 %v525
        %v1385 = vunpack.c.l.b16 %v526
        %v1386 = vunpack.c.l.b16 %v527
        %v1387 = vunpack.c.l.b16 %v528
        %v1388 = vunpack.c.l.b16 %v529
        %v1389 = vunpack.c.l.b16 %v530
        %v1390 = vunpack.c.l.b16 %v531
        %v1391 = vunpack.c.l.b16 %v532
        %v1392 = vunpack.c.l.b16 %v533
        %v1393 = vunpack.c.l.b16 %v534
        %v1394 = vunpack.c.l.b16 %v535
        %v1395 = vunpack.c.l.b16 %v536
        %v1396 = vunpack.c.l.b16 %v537
        %v1397 = vunpack.c.l.b16 %v538
        %v1398 = vunpack.c.l.b16 %v539
        %v1399 = vunpack.c.l.b16 %v540
        %v1400 = vunpack.c.l.b16 %v541
        %v1401 = vunpack.c.l.b16 %v542
        %v1402 = vunpack.c.l.b16 %v543
        %v1403 = vunpack.c.l.b16 %v544
        %v1404 = vunpack.c.l.b16 %v545
        %v1405 = vunpack.c.l.b16 %v546
        %v1406 = vunpack.c.l.b16 %v547
        %v1407 = vunpack.c.l.b16 %v548
        %v1408 = vunpack.c.l.b16 %v549
        %v1409 = vunpack.c.l.b16 %v550
        %v1410 = vunpack.c.l.b16 %v551
        %v1411 = vunpack.c.l.b16 %v552
        %v1412 = vunpack.c.l.b16 %v553
        %v1413 = vunpack.c.l.b16 %v554
        %v1414 = vunpack.c.l.b16 %v555
        %v1415 = vunpack.c.l.b16 %v556
        %v1416 = vunpack.c.l.b16 %v557
        %v1417 = vunpack.c.l.b16 %v558
        %v1418 = vunpack.c.l.b16 %v559
        %v1419 = vunpack.c.l.b16 %v560
        %v1420 = vunpack.c.l.b16 %v561
        %v1421 = vunpack.c.l.b16 %v562
        %v1422 = vunpack.c.l.b16 %v563
        %v1423 = vunpack.c.l.b16 %v564
        %v1424 = vunpack.c.l.b16 %v565
        %v1425 = vunpack.c.l.b16 %v566
        %v1426 = vunpack.c.l.b16 %v567
        %v1427 = vunpack.c.l.b16 %v568
        %v1428 = vunpack.c.l.b16 %v569
        %v1429 = vunpack.c.l.b16 %v570
        %v1430 = vunpack.c.l.b16 %v571
        %v1431 = vunpack.c.l.b16 %v572
        %v1432 = vunpack.c.l.b16 %v573
        %v1433 = vunpack.c.l.b16 %v574
        %v1434 = vunpack.c.l.b16 %v575
        %v1435 = vunpack.c.l.b16 %v576
        %v1436 = vunpack.c.l.b16 %v577
        %v1437 = vunpack.c.l.b16 %v578
        %v1438 = vunpack.c.l.b16 %v579
        %v1439 = vunpack.c.l.b16 %v580
        %v1440 = vunpack.c.l.b16 %v581
        %v1441 = vunpack.c.l.b16 %v582
        %v1442 = vunpack.c.l.b16 %v583
        %v1443 = vunpack.c.l.b16 %v584
        %v1444 = vunpack.c.l.b16 %v585
        %v1445 = vunpack.c.l.b16 %v586
        %v1446 = vunpack.c.l.b16 %v587
        %v1447 = vunpack.c.l.b16 %v588
        %v1448 = vunpack.c.l.b16 %v589
        %v1449 = vunpack.c.l.b16 %v590
        %v1450 = vunpack.c.l.b16 %v591
        %v1451 = vunpack.c.l.b16 %v592
        %v1452 = vunpack.c.l.b16 %v593
        %v1453 = vunpack.c.l.b16 %v594
        %v1454 = vunpack.c.l.b16 %v595
        %v1455 = vunpack.c.l.b16 %v596
        %v1456 = vunpack.c.l.b16 %v597
        %v1457 = vunpack.c.l.b16 %v598
        %v1458 = vunpack.c.l.b16 %v599
        %v1459 = vunpack.c.l.b16 %v600
        %v1460 = vunpack.c.l.b16 %v601
        %v1461 = vunpack.c.l.b16 %v602
        %v1462 = vunpack.c.l.b16 %v603
        %v1463 = vunpack.c.l.b16 %v604
        %v1464 = vunpack.c.l.b16 %v605
        %v1465 = vunpack.c.l.b16 %v606
        %v1466 = vunpack.c.l.b16 %v607
        %v1467 = vunpack.c.l.b16 %v608
        %v1468 = vunpack.c.l.b16 %v609
        %v1469 = vunpack.c.l.b16 %v610
        %v1470 = vunpack.c.l.b16 %v611
        %v1471 = vunpack.c.l.b16 %v612
        %v1472 = vunpack.c.l.b16 %v613
        %v1473 = vunpack.c.l.b16 %v614
        %v1474 = vunpack.c.l.b16 %v615
        %v1475 = vunpack.c.l.b16 %v616
        %v1476 = vunpack.c.l.b16 %v617
        %v1477 = vunpack.c.l.b16 %v618
        %v1478 = vunpack.c.l.b16 %v619
        %v1479 = vpack.c.b16 %v1096, %v1095
        %v1480 = vpack.c.b16 %v1098, %v1097
        %v1481 = vpack.c.b16 %v1100, %v1099
        %v1482 = vpack.c.b16 %v1102, %v1101
        %v1483 = vpack.c.b16 %v1104, %v1103
        %v1484 = vpack.c.b16 %v1106, %v1105
        %v1485 = vpack.c.b16 %v1108, %v1107
        %v1486 = vpack.c.b16 %v1110, %v1109
        %v1487 = vpack.c.b16 %v1112, %v1111
        %v1488 = vpack.c.b16 %v1114, %v1113
        %v1489 = vpack.c.b16 %v1116, %v1115
        %v1490 = vpack.c.b16 %v1118, %v1117
        %v1491 = vpack.c.b16 %v1120, %v1119
        %v1492 = vpack.c.b16 %v1122, %v1121
        %v1493 = vpack.c.b16 %v1124, %v1123
        %v1494 = vpack.c.b16 %v1126, %v1125
        %v1495 = vpack.c.b16 %v1128, %v1127
        %v1496 = vpack.c.b16 %v1130, %v1129
        %v1497 = vpack.c.b16 %v1132, %v1131
        %v1498 = vpack.c.b16 %v1134, %v1133
        %v1499 = vpack.c.b16 %v1136, %v1135
        %v1500 = vpack.c.b16 %v1138, %v1137
        %v1501 = vpack.c.b16 %v1140, %v1139
        %v1502 = vpack.c.b16 %v1142, %v1141
        %v1503 = vpack.c.b16 %v1144, %v1143
        %v1504 = vpack.c.b16 %v1146, %v1145
        %v1505 = vpack.c.b16 %v1148, %v1147
        %v1506 = vpack.c.b16 %v1150, %v1149
        %v1507 = vpack.c.b16 %v1152, %v1151
        %v1508 = vpack.c.b16 %v1154, %v1153
        %v1509 = vpack.c.b16 %v1156, %v1155
        %v1510 = vpack.c.b16 %v1158, %v1157
        %v1511 = vpack.c.b16 %v1160, %v1159
        %v1512 = vpack.c.b16 %v1162, %v1161
        %v1513 = vpack.c.b16 %v1164, %v1163
        %v1514 = vpack.c.b16 %v1166, %v1165
        %v1515 = vpack.c.b16 %v1168, %v1167
        %v1516 = vpack.c.b16 %v1170, %v1169
        %v1517 = vpack.c.b16 %v1172, %v1171
        %v1518 = vpack.c.b16 %v1174, %v1173
        %v1519 = vpack.c.b16 %v1176, %v1175
        %v1520 = vpack.c.b16 %v1178, %v1177
        %v1521 = vpack.c.b16 %v1180, %v1179
        %v1522 = vpack.c.b16 %v1182, %v1181
        %v1523 = vpack.c.b16 %v1184, %v1183
        %v1524 = vpack.c.b16 %v1186, %v1185
        %v1525 = vpack.c.b16 %v1188, %v1187
        %v1526 = vpack.c.b16 %v1190, %v1189
        %v1527 = vpack.c.b16 %v1192, %v1191
        %v1528 = vpack.c.b16 %v1194, %v1193
        %v1529 = vpack.c.b16 %v1196, %v1195
        %v1530 = vpack.c.b16 %v1198, %v1197
        %v1531 = vpack.c.b16 %v1200, %v1199
        %v1532 = vpack.c.b16 %v1202, %v1201
        %v1533 = vpack.c.b16 %v1204, %v1203
        %v1534 = vpack.c.b16 %v1206, %v1205
        %v1535 = vpack.c.b16 %v1208, %v1207
        %v1536 = vpack.c.b16 %v1210, %v1209
        %v1537 = vpack.c.b16 %v1212, %v1211
        %v1538 = vpack.c.b16 %v1214, %v1213
        %v1539 = vpack.c.b16 %v1216, %v1215
        %v1540 = vpack.c.b16 %v1218, %v1217
        %v1541 = vpack.c.b16 %v1220, %v1219
        %v1542 = vpack.c.b16 %v1222, %v1221
        %v1543 = vpack.c.b16 %v1224, %v1223
        %v1544 = vpack.c.b16 %v1226, %v1225
        %v1545 = vpack.c.b16 %v1228, %v1227
        %v1546 = vpack.c.b16 %v1230, %v1229
        %v1547 = vpack.c.b16 %v1232, %v1231
        %v1548 = vpack.c.b16 %v1234, %v1233
        %v1549 = vpack.c.b16 %v1236, %v1235
        %v1550 = vpack.c.b16 %v1238, %v1237
        %v1551 = vpack.c.b16 %v1240, %v1239
        %v1552 = vpack.c.b16 %v1242, %v1241
        %v1553 = vpack.c.b16 %v1244, %v1243
        %v1554 = vpack.c.b16 %v1246, %v1245
        %v1555 = vpack.c.b16 %v1248, %v1247
        %v1556 = vpack.c.b16 %v1250, %v1249
        %v1557 = vpack.c.b16 %v1252, %v1251
        %v1558 = vpack.c.b16 %v1254, %v1253
        %v1559 = vpack.c.b16 %v1256, %v1255
        %v1560 = vpack.c.b16 %v1258, %v1257
        %v1561 = vpack.c.b16 %v1260, %v1259
        %v1562 = vpack.c.b16 %v1262, %v1261
        %v1563 = vpack.c.b16 %v1264, %v1263
        %v1564 = vpack.c.b16 %v1266, %v1265
        %v1565 = vpack.c.b16 %v1268, %v1267
        %v1566 = vpack.c.b16 %v1270, %v1269
        %v1567 = vpack.c.b16 %v1272, %v1271
        %v1568 = vpack.c.b16 %v1274, %v1273
        %v1569 = vpack.c.b16 %v1276, %v1275
        %v1570 = vpack.c.b16 %v1278, %v1277
        %v1571 = vpack.c.b16 %v1280, %v1279
        %v1572 = vpack.c.b16 %v1282, %v1281
        %v1573 = vpack.c.b16 %v1284, %v1283
        %v1574 = vpack.c.b16 %v1286, %v1285
        %v1575 = vpack.c.b16 %v1288, %v1287
        %v1576 = vpack.c.b16 %v1290, %v1289
        %v1577 = vpack.c.b16 %v1292, %v1291
        %v1578 = vpack.c.b16 %v1294, %v1293
        %v1579 = vpack.c.b16 %v1296, %v1295
        %v1580 = vpack.c.b16 %v1298, %v1297
        %v1581 = vpack.c.b16 %v1300, %v1299
        %v1582 = vpack.c.b16 %v1302, %v1301
        %v1583 = vpack.c.b16 %v1304, %v1303
        %v1584 = vpack.c.b16 %v1306, %v1305
        %v1585 = vpack.c.b16 %v1308, %v1307
        %v1586 = vpack.c.b16 %v1310, %v1309
        %v1587 = vpack.c.b16 %v1312, %v1311
        %v1588 = vpack.c.b16 %v1314, %v1313
        %v1589 = vpack.c.b16 %v1316, %v1315
        %v1590 = vpack.c.b16 %v1318, %v1317
        %v1591 = vpack.c.b16 %v1320, %v1319
        %v1592 = vpack.c.b16 %v1322, %v1321
        %v1593 = vpack.c.b16 %v1324, %v1323
        %v1594 = vpack.c.b16 %v1326, %v1325
        %v1595 = vpack.c.b16 %v1328, %v1327
        %v1596 = vpack.c.b16 %v1330, %v1329
        %v1597 = vpack.c.b16 %v1332, %v1331
        %v1598 = vpack.c.b16 %v1334, %v1333
        %v1599 = vpack.c.b16 %v1336, %v1335
        %v1600 = vpack.c.b16 %v1338, %v1337
        %v1601 = vpack.c.b16 %v1340, %v1339
        %v1602 = vpack.c.b16 %v1342, %v1341
        %v1603 = vpack.c.b16 %v1344, %v1343
        %v1604 = vpack.c.b16 %v1346, %v1345
        %v1605 = vpack.c.b16 %v1348, %v1347
        %v1606 = vpack.c.b16 %v1350, %v1349
        %v1607 = vpack.c.b16 %v1352, %v1351
        %v1608 = vpack.c.b16 %v1354, %v1353
        %v1609 = vpack.c.b16 %v1356, %v1355
        %v1610 = vpack.c.b16 %v1358, %v1357
        %v1611 = vpack.c.b16 %v1360, %v1359
        %v1612 = vpack.c.b16 %v1362, %v1361
        %v1613 = vpack.c.b16 %v1364, %v1363
        %v1614 = vpack.c.b16 %v1366, %v1365
        %v1615 = vpack.c.b16 %v1368, %v1367
        %v1616 = vpack.c.b16 %v1370, %v1369
        %v1617 = vpack.c.b16 %v1372, %v1371
        %v1618 = vpack.c.b16 %v1374, %v1373
        %v1619 = vpack.c.b16 %v1376, %v1375
        %v1620 = vpack.c.b16 %v1378, %v1377
        %v1621 = vpack.c.b16 %v1380, %v1379
        %v1622 = vpack.c.b16 %v1382, %v1381
        %v1623 = vpack.c.b16 %v1384, %v1383
        %v1624 = vpack.c.b16 %v1386, %v1385
        %v1625 = vpack.c.b16 %v1388, %v1387
        %v1626 = vpack.c.b16 %v1390, %v1389
        %v1627 = vpack.c.b16 %v1392, %v1391
        %v1628 = vpack.c.b16 %v1394, %v1393
        %v1629 = vpack.c.b16 %v1396, %v1395
        %v1630 = vpack.c.b16 %v1398, %v1397
        %v1631 = vpack.c.b16 %v1400, %v1399
        %v1632 = vpack.c.b16 %v1402, %v1401
        %v1633 = vpack.c.b16 %v1404, %v1403
        %v1634 = vpack.c.b16 %v1406, %v1405
        %v1635 = vpack.c.b16 %v1408, %v1407
        %v1636 = vpack.c.b16 %v1410, %v1409
        %v1637 = vpack.c.b16 %v1412, %v1411
        %v1638 = vpack.c.b16 %v1414, %v1413
        %v1639 = vpack.c.b16 %v1416, %v1415
        %v1640 = vpack.c.b16 %v1418, %v1417
        %v1641 = vpack.c.b16 %v1420, %v1419
        %v1642 = vpack.c.b16 %v1422, %v1421
        %v1643 = vpack.c.b16 %v1424, %v1423
        %v1644 = vpack.c.b16 %v1426, %v1425
        %v1645 = vpack.c.b16 %v1428, %v1427
        %v1646 = vpack.c.b16 %v1430, %v1429
        %v1647 = vpack.c.b16 %v1432, %v1431
        %v1648 = vpack.c.b16 %v1434, %v1433
        %v1649 = vpack.c.b16 %v1436, %v1435
        %v1650 = vpack.c.b16 %v1438, %v1437
        %v1651 = vpack.c.b16 %v1440, %v1439
        %v1652 = vpack.c.b16 %v1442, %v1441
        %v1653 = vpack.c.b16 %v1444, %v1443
        %v1654 = vpack.c.b16 %v1446, %v1445
        %v1655 = vpack.c.b16 %v1448, %v1447
        %v1656 = vpack.c.b16 %v1450, %v1449
        %v1657 = vpack.c.b16 %v1452, %v1451
        %v1658 = vpack.c.b16 %v1454, %v1453
        %v1659 = vpack.c.b16 %v1456, %v1455
        %v1660 = vpack.c.b16 %v1458, %v1457
        %v1661 = vpack.c.b16 %v1460, %v1459
        %v1662 = vpack.c.b16 %v1462, %v1461
        %v1663 = vpack.c.b16 %v1464, %v1463
        %v1664 = vpack.c.b16 %v1466, %v1465
        %v1665 = vpack.c.b16 %v1468, %v1467
        %v1666 = vpack.c.b16 %v1470, %v1469
        %v1667 = vpack.c.b16 %v1472, %v1471
        %v1668 = vpack.c.b16 %v1474, %v1473
        %v1669 = vpack.c.b16 %v1476, %v1475
        %v1670 = vpack.c.b16 %v1478, %v1477
        %1863 = vmatprep.subr.bf16.mxu0 0
        %1864 = vmatpush1.bf16.msra.mxu0 %v1479
        %1865 = vmatprep.subr.bf16.mxu0 0
        %1866 = vmatpush1.bf16.msra.mxu0 %v1480
        %1867 = vmatprep.subr.bf16.mxu0 0
        %1868 = vmatpush1.bf16.msra.mxu0 %v1481
        %1869 = vmatprep.subr.bf16.mxu0 0
        %1870 = vmatpush1.bf16.msra.mxu0 %v1482
        %1871 = vmatprep.subr.bf16.mxu0 0
        %1872 = vmatpush1.bf16.msra.mxu0 %v1483
        %1873 = vmatprep.subr.bf16.mxu0 0
        %1874 = vmatpush1.bf16.msra.mxu0 %v1484
        %1875 = vmatprep.subr.bf16.mxu0 0
        %1876 = vmatpush1.bf16.msra.mxu0 %v1485
        %1877 = vmatprep.subr.bf16.mxu0 0
        %1878 = vmatpush1.bf16.msra.mxu0 %v1486
        %1879 = vmatprep.subr.bf16.mxu0 0
        %1880 = vmatpush1.bf16.msra.mxu0 %v1487
        %1881 = vmatprep.subr.bf16.mxu0 0
        %1882 = vmatpush1.bf16.msra.mxu0 %v1488
        %1883 = vmatprep.subr.bf16.mxu0 0
        %1884 = vmatpush1.bf16.msra.mxu0 %v1489
        %1885 = vmatprep.subr.bf16.mxu0 0
        %1886 = vmatpush1.bf16.msra.mxu0 %v1490
        %1887 = vmatprep.subr.bf16.mxu0 0
        %1888 = vmatpush1.bf16.msra.mxu0 %v1491
        %1889 = vmatprep.subr.bf16.mxu0 0
        %1890 = vmatpush1.bf16.msra.mxu0 %v1492
        %1891 = vmatprep.subr.bf16.mxu0 0
        %1892 = vmatpush1.bf16.msra.mxu0 %v1493
        %1893 = vmatprep.subr.bf16.mxu0 0
        %1894 = vmatpush1.bf16.msra.mxu0 %v1494
        %1895 = vmatprep.mubr.bf16.mxu0 %v664
        %1896 = vmatmul.mubr.bf16.gmra.mrb[0].mxu0 %v663
        %v1897 = vpop.f32.mrb[0].mxu0
        %v1898 = vadd.f32 %v625, %v1897
        %v1899 = vpop.f32.mrb[0].mxu0
        %v1900 = vpop.f32.mrb[0].mxu0
        %v1901 = vpop.f32.mrb[0].mxu0
        %1902 = vdwg.mxu0
        %1903 = vmatprep.subr.bf16.mxu0 0
        %1904 = vmatpush1.bf16.msra.mxu0 %v1495
        %1905 = vmatprep.subr.bf16.mxu0 0
        %1906 = vmatpush1.bf16.msra.mxu0 %v1496
        %1907 = vmatprep.subr.bf16.mxu0 0
        %1908 = vmatpush1.bf16.msra.mxu0 %v1497
        %1909 = vmatprep.subr.bf16.mxu0 0
        %1910 = vmatpush1.bf16.msra.mxu0 %v1498
        %1911 = vmatprep.subr.bf16.mxu0 0
        %1912 = vmatpush1.bf16.msra.mxu0 %v1499
        %1913 = vmatprep.subr.bf16.mxu0 0
        %1914 = vmatpush1.bf16.msra.mxu0 %v1500
        %1915 = vmatprep.subr.bf16.mxu0 0
        %1916 = vmatpush1.bf16.msra.mxu0 %v1501
        %1917 = vmatprep.subr.bf16.mxu0 0
        %1918 = vmatpush1.bf16.msra.mxu0 %v1502
        %1919 = vmatprep.subr.bf16.mxu0 0
        %1920 = vmatpush1.bf16.msra.mxu0 %v1503
        %1921 = vmatprep.subr.bf16.mxu0 0
        %1922 = vmatpush1.bf16.msra.mxu0 %v1504
        %1923 = vmatprep.subr.bf16.mxu0 0
        %1924 = vmatpush1.bf16.msra.mxu0 %v1505
        %1925 = vmatprep.subr.bf16.mxu0 0
        %1926 = vmatpush1.bf16.msra.mxu0 %v1506
        %1927 = vmatprep.subr.bf16.mxu0 0
        %1928 = vmatpush1.bf16.msra.mxu0 %v1507
        %1929 = vmatprep.subr.bf16.mxu0 0
        %1930 = vmatpush1.bf16.msra.mxu0 %v1508
        %1931 = vmatprep.subr.bf16.mxu0 0
        %1932 = vmatpush1.bf16.msra.mxu0 %v1509
        %1933 = vmatprep.subr.bf16.mxu0 0
        %1934 = vmatpush1.bf16.msra.mxu0 %v1510
        %1935 = vmatprep.mubr.bf16.mxu0 %v666
        %1936 = vmatmul.mubr.bf16.gmra.mrb[0].mxu0 %v665
        %v1937 = vpop.f32.mrb[0].mxu0
        %v1938 = vadd.f32 %v1898, %v1937
        %v1939 = vpop.f32.mrb[0].mxu0
        %v1940 = vpop.f32.mrb[0].mxu0
        %v1941 = vpop.f32.mrb[0].mxu0
        %1942 = vdwg.mxu0
        %1943 = vmatprep.subr.bf16.mxu0 0
        %1944 = vmatpush1.bf16.msra.mxu0 %v1511
        %1945 = vmatprep.subr.bf16.mxu0 0
        %1946 = vmatpush1.bf16.msra.mxu0 %v1512
        %1947 = vmatprep.subr.bf16.mxu0 0
        %1948 = vmatpush1.bf16.msra.mxu0 %v1513
        %1949 = vmatprep.subr.bf16.mxu0 0
        %1950 = vmatpush1.bf16.msra.mxu0 %v1514
        %1951 = vmatprep.subr.bf16.mxu0 0
        %1952 = vmatpush1.bf16.msra.mxu0 %v1515
        %1953 = vmatprep.subr.bf16.mxu0 0
        %1954 = vmatpush1.bf16.msra.mxu0 %v1516
        %1955 = vmatprep.subr.bf16.mxu0 0
        %1956 = vmatpush1.bf16.msra.mxu0 %v1517
        %1957 = vmatprep.subr.bf16.mxu0 0
        %1958 = vmatpush1.bf16.msra.mxu0 %v1518
        %1959 = vmatprep.subr.bf16.mxu0 0
        %1960 = vmatpush1.bf16.msra.mxu0 %v1519
        %1961 = vmatprep.subr.bf16.mxu0 0
        %1962 = vmatpush1.bf16.msra.mxu0 %v1520
        %1963 = vmatprep.subr.bf16.mxu0 0
        %1964 = vmatpush1.bf16.msra.mxu0 %v1521
        %1965 = vmatprep.subr.bf16.mxu0 0
        %1966 = vmatpush1.bf16.msra.mxu0 %v1522
        %1967 = vmatprep.subr.bf16.mxu0 0
        %1968 = vmatpush1.bf16.msra.mxu0 %v1523
        %1969 = vmatprep.subr.bf16.mxu0 0
        %1970 = vmatpush1.bf16.msra.mxu0 %v1524
        %1971 = vmatprep.subr.bf16.mxu0 0
        %1972 = vmatpush1.bf16.msra.mxu0 %v1525
        %1973 = vmatprep.subr.bf16.mxu0 0
        %1974 = vmatpush1.bf16.msra.mxu0 %v1526
        %1975 = vmatprep.mubr.bf16.mxu0 %v668
        %1976 = vmatmul.mubr.bf16.gmra.mrb[0].mxu0 %v667
        %v1977 = vpop.f32.mrb[0].mxu0
        %v1978 = vadd.f32 %v1938, %v1977
        %v1979 = vpop.f32.mrb[0].mxu0
        %v1980 = vpop.f32.mrb[0].mxu0
        %v1981 = vpop.f32.mrb[0].mxu0
        %1982 = vdwg.mxu0
        %1983 = vmatprep.subr.bf16.mxu0 0
        %1984 = vmatpush1.bf16.msra.mxu0 %v1527
        %1985 = vmatprep.subr.bf16.mxu0 0
        %1986 = vmatpush1.bf16.msra.mxu0 %v1528
        %1987 = vmatprep.subr.bf16.mxu0 0
        %1988 = vmatpush1.bf16.msra.mxu0 %v1529
        %1989 = vmatprep.subr.bf16.mxu0 0
        %1990 = vmatpush1.bf16.msra.mxu0 %v1530
        %1991 = vmatprep.subr.bf16.mxu0 0
        %1992 = vmatpush1.bf16.msra.mxu0 %v1531
        %1993 = vmatprep.subr.bf16.mxu0 0
        %1994 = vmatpush1.bf16.msra.mxu0 %v1532
        %1995 = vmatprep.subr.bf16.mxu0 0
        %1996 = vmatpush1.bf16.msra.mxu0 %v1533
        %1997 = vmatprep.subr.bf16.mxu0 0
        %1998 = vmatpush1.bf16.msra.mxu0 %v1534
        %1999 = vmatprep.subr.bf16.mxu0 0
        %2000 = vmatpush1.bf16.msra.mxu0 %v1535
        %2001 = vmatprep.subr.bf16.mxu0 0
        %2002 = vmatpush1.bf16.msra.mxu0 %v1536
        %2003 = vmatprep.subr.bf16.mxu0 0
        %2004 = vmatpush1.bf16.msra.mxu0 %v1537
        %2005 = vmatprep.subr.bf16.mxu0 0
        %2006 = vmatpush1.bf16.msra.mxu0 %v1538
        %2007 = vmatprep.subr.bf16.mxu0 0
        %2008 = vmatpush1.bf16.msra.mxu0 %v1539
        %2009 = vmatprep.subr.bf16.mxu0 0
        %2010 = vmatpush1.bf16.msra.mxu0 %v1540
        %2011 = vmatprep.subr.bf16.mxu0 0
        %2012 = vmatpush1.bf16.msra.mxu0 %v1541
        %2013 = vmatprep.subr.bf16.mxu0 0
        %2014 = vmatpush1.bf16.msra.mxu0 %v1542
        %2015 = vmatprep.mubr.bf16.mxu0 %v670
        %2016 = vmatmul.mubr.bf16.gmra.mrb[0].mxu0 %v669
        %v2017 = vpop.f32.mrb[0].mxu0
        %v2018 = vadd.f32 %v1978, %v2017
        %v2019 = vpop.f32.mrb[0].mxu0
        %v2020 = vpop.f32.mrb[0].mxu0
        %v2021 = vpop.f32.mrb[0].mxu0
        %2022 = vdwg.mxu0
        %2023 = vmatprep.subr.bf16.mxu0 0
        %2024 = vmatpush1.bf16.msra.mxu0 %v1543
        %2025 = vmatprep.subr.bf16.mxu0 0
        %2026 = vmatpush1.bf16.msra.mxu0 %v1544
        %2027 = vmatprep.subr.bf16.mxu0 0
        %2028 = vmatpush1.bf16.msra.mxu0 %v1545
        %2029 = vmatprep.subr.bf16.mxu0 0
        %2030 = vmatpush1.bf16.msra.mxu0 %v1546
        %2031 = vmatprep.subr.bf16.mxu0 0
        %2032 = vmatpush1.bf16.msra.mxu0 %v1547
        %2033 = vmatprep.subr.bf16.mxu0 0
        %2034 = vmatpush1.bf16.msra.mxu0 %v1548
        %2035 = vmatprep.subr.bf16.mxu0 0
        %2036 = vmatpush1.bf16.msra.mxu0 %v1549
        %2037 = vmatprep.subr.bf16.mxu0 0
        %2038 = vmatpush1.bf16.msra.mxu0 %v1550
        %2039 = vmatprep.subr.bf16.mxu0 0
        %2040 = vmatpush1.bf16.msra.mxu0 %v1551
        %2041 = vmatprep.subr.bf16.mxu0 0
        %2042 = vmatpush1.bf16.msra.mxu0 %v1552
        %2043 = vmatprep.subr.bf16.mxu0 0
        %2044 = vmatpush1.bf16.msra.mxu0 %v1553
        %2045 = vmatprep.subr.bf16.mxu0 0
        %2046 = vmatpush1.bf16.msra.mxu0 %v1554
        %2047 = vmatprep.subr.bf16.mxu0 0
        %2048 = vmatpush1.bf16.msra.mxu0 %v1555
        %2049 = vmatprep.subr.bf16.mxu0 0
        %2050 = vmatpush1.bf16.msra.mxu0 %v1556
        %2051 = vmatprep.subr.bf16.mxu0 0
        %2052 = vmatpush1.bf16.msra.mxu0 %v1557
        %2053 = vmatprep.subr.bf16.mxu0 0
        %2054 = vmatpush1.bf16.msra.mxu0 %v1558
        %2055 = vmatprep.mubr.bf16.mxu0 %v672
        %2056 = vmatmul.mubr.bf16.gmra.mrb[0].mxu0 %v671
        %v2057 = vpop.f32.mrb[0].mxu0
        %v2058 = vadd.f32 %v2018, %v2057
        %v2059 = vpop.f32.mrb[0].mxu0
        %v2060 = vpop.f32.mrb[0].mxu0
        %v2061 = vpop.f32.mrb[0].mxu0
        %2062 = vdwg.mxu0
        %2063 = vmatprep.subr.bf16.mxu0 0
        %2064 = vmatpush1.bf16.msra.mxu0 %v1559
        %2065 = vmatprep.subr.bf16.mxu0 0
        %2066 = vmatpush1.bf16.msra.mxu0 %v1560
        %2067 = vmatprep.subr.bf16.mxu0 0
        %2068 = vmatpush1.bf16.msra.mxu0 %v1561
        %2069 = vmatprep.subr.bf16.mxu0 0
        %2070 = vmatpush1.bf16.msra.mxu0 %v1562
        %2071 = vmatprep.subr.bf16.mxu0 0
        %2072 = vmatpush1.bf16.msra.mxu0 %v1563
        %2073 = vmatprep.subr.bf16.mxu0 0
        %2074 = vmatpush1.bf16.msra.mxu0 %v1564
        %2075 = vmatprep.subr.bf16.mxu0 0
        %2076 = vmatpush1.bf16.msra.mxu0 %v1565
        %2077 = vmatprep.subr.bf16.mxu0 0
        %2078 = vmatpush1.bf16.msra.mxu0 %v1566
        %2079 = vmatprep.subr.bf16.mxu0 0
        %2080 = vmatpush1.bf16.msra.mxu0 %v1567
        %2081 = vmatprep.subr.bf16.mxu0 0
        %2082 = vmatpush1.bf16.msra.mxu0 %v1568
        %2083 = vmatprep.subr.bf16.mxu0 0
        %2084 = vmatpush1.bf16.msra.mxu0 %v1569
        %2085 = vmatprep.subr.bf16.mxu0 0
        %2086 = vmatpush1.bf16.msra.mxu0 %v1570
        %2087 = vmatprep.subr.bf16.mxu0 0
        %2088 = vmatpush1.bf16.msra.mxu0 %v1571
        %2089 = vmatprep.subr.bf16.mxu0 0
        %2090 = vmatpush1.bf16.msra.mxu0 %v1572
        %2091 = vmatprep.subr.bf16.mxu0 0
        %2092 = vmatpush1.bf16.msra.mxu0 %v1573
        %2093 = vmatprep.subr.bf16.mxu0 0
        %2094 = vmatpush1.bf16.msra.mxu0 %v1574
        %2095 = vmatprep.mubr.bf16.mxu0 %v674
        %2096 = vmatmul.mubr.bf16.gmra.mrb[0].mxu0 %v673
        %v2097 = vpop.f32.mrb[0].mxu0
        %v2098 = vadd.f32 %v2058, %v2097
        %v2099 = vpop.f32.mrb[0].mxu0
        %v2100 = vpop.f32.mrb[0].mxu0
        %v2101 = vpop.f32.mrb[0].mxu0
        %2102 = vdwg.mxu0
        %2103 = vmatprep.subr.bf16.mxu0 0
        %2104 = vmatpush1.bf16.msra.mxu0 %v1575
        %2105 = vmatprep.subr.bf16.mxu0 0
        %2106 = vmatpush1.bf16.msra.mxu0 %v1576
        %2107 = vmatprep.subr.bf16.mxu0 0
        %2108 = vmatpush1.bf16.msra.mxu0 %v1577
        %2109 = vmatprep.subr.bf16.mxu0 0
        %2110 = vmatpush1.bf16.msra.mxu0 %v1578
        %2111 = vmatprep.subr.bf16.mxu0 0
        %2112 = vmatpush1.bf16.msra.mxu0 %v1579
        %2113 = vmatprep.subr.bf16.mxu0 0
        %2114 = vmatpush1.bf16.msra.mxu0 %v1580
        %2115 = vmatprep.subr.bf16.mxu0 0
        %2116 = vmatpush1.bf16.msra.mxu0 %v1581
        %2117 = vmatprep.subr.bf16.mxu0 0
        %2118 = vmatpush1.bf16.msra.mxu0 %v1582
        %2119 = vmatprep.subr.bf16.mxu0 0
        %2120 = vmatpush1.bf16.msra.mxu0 %v1583
        %2121 = vmatprep.subr.bf16.mxu0 0
        %2122 = vmatpush1.bf16.msra.mxu0 %v1584
        %2123 = vmatprep.subr.bf16.mxu0 0
        %2124 = vmatpush1.bf16.msra.mxu0 %v1585
        %2125 = vmatprep.subr.bf16.mxu0 0
        %2126 = vmatpush1.bf16.msra.mxu0 %v1586
        %2127 = vmatprep.subr.bf16.mxu0 0
        %2128 = vmatpush1.bf16.msra.mxu0 %v1587
        %2129 = vmatprep.subr.bf16.mxu0 0
        %2130 = vmatpush1.bf16.msra.mxu0 %v1588
        %2131 = vmatprep.subr.bf16.mxu0 0
        %2132 = vmatpush1.bf16.msra.mxu0 %v1589
        %2133 = vmatprep.subr.bf16.mxu0 0
        %2134 = vmatpush1.bf16.msra.mxu0 %v1590
        %2135 = vmatprep.mubr.bf16.mxu0 %v676
        %2136 = vmatmul.mubr.bf16.gmra.mrb[0].mxu0 %v675
        %v2137 = vpop.f32.mrb[0].mxu0
        %v2138 = vadd.f32 %v2098, %v2137
        %v2139 = vpop.f32.mrb[0].mxu0
        %v2140 = vpop.f32.mrb[0].mxu0
        %v2141 = vpop.f32.mrb[0].mxu0
        %2142 = vdwg.mxu0
        %2143 = vmatprep.subr.bf16.mxu0 0
        %2144 = vmatpush1.bf16.msra.mxu0 %v1591
        %2145 = vmatprep.subr.bf16.mxu0 0
        %2146 = vmatpush1.bf16.msra.mxu0 %v1592
        %2147 = vmatprep.subr.bf16.mxu0 0
        %2148 = vmatpush1.bf16.msra.mxu0 %v1593
        %2149 = vmatprep.subr.bf16.mxu0 0
        %2150 = vmatpush1.bf16.msra.mxu0 %v1594
        %2151 = vmatprep.subr.bf16.mxu0 0
        %2152 = vmatpush1.bf16.msra.mxu0 %v1595
        %2153 = vmatprep.subr.bf16.mxu0 0
        %2154 = vmatpush1.bf16.msra.mxu0 %v1596
        %2155 = vmatprep.subr.bf16.mxu0 0
        %2156 = vmatpush1.bf16.msra.mxu0 %v1597
        %2157 = vmatprep.subr.bf16.mxu0 0
        %2158 = vmatpush1.bf16.msra.mxu0 %v1598
        %2159 = vmatprep.subr.bf16.mxu0 0
        %2160 = vmatpush1.bf16.msra.mxu0 %v1599
        %2161 = vmatprep.subr.bf16.mxu0 0
        %2162 = vmatpush1.bf16.msra.mxu0 %v1600
        %2163 = vmatprep.subr.bf16.mxu0 0
        %2164 = vmatpush1.bf16.msra.mxu0 %v1601
        %2165 = vmatprep.subr.bf16.mxu0 0
        %2166 = vmatpush1.bf16.msra.mxu0 %v1602
        %2167 = vmatprep.subr.bf16.mxu0 0
        %2168 = vmatpush1.bf16.msra.mxu0 %v1603
        %2169 = vmatprep.subr.bf16.mxu0 0
        %2170 = vmatpush1.bf16.msra.mxu0 %v1604
        %2171 = vmatprep.subr.bf16.mxu0 0
        %2172 = vmatpush1.bf16.msra.mxu0 %v1605
        %2173 = vmatprep.subr.bf16.mxu0 0
        %2174 = vmatpush1.bf16.msra.mxu0 %v1606
        %2175 = vmatprep.mubr.bf16.mxu0 %v678
        %2176 = vmatmul.mubr.bf16.gmra.mrb[0].mxu0 %v677
        %v2177 = vpop.f32.mrb[0].mxu0
        %v2178 = vadd.f32 %v2138, %v2177
        %v2179 = vpop.f32.mrb[0].mxu0
        %v2180 = vpop.f32.mrb[0].mxu0
        %v2181 = vpop.f32.mrb[0].mxu0
        %2182 = vdwg.mxu0
        %2183 = vmatprep.subr.bf16.mxu0 0
        %2184 = vmatpush1.bf16.msra.mxu0 %v1607
        %2185 = vmatprep.subr.bf16.mxu0 0
        %2186 = vmatpush1.bf16.msra.mxu0 %v1608
        %2187 = vmatprep.subr.bf16.mxu0 0
        %2188 = vmatpush1.bf16.msra.mxu0 %v1609
        %2189 = vmatprep.subr.bf16.mxu0 0
        %2190 = vmatpush1.bf16.msra.mxu0 %v1610
        %2191 = vmatprep.subr.bf16.mxu0 0
        %2192 = vmatpush1.bf16.msra.mxu0 %v1611
        %2193 = vmatprep.subr.bf16.mxu0 0
        %2194 = vmatpush1.bf16.msra.mxu0 %v1612
        %2195 = vmatprep.subr.bf16.mxu0 0
        %2196 = vmatpush1.bf16.msra.mxu0 %v1613
        %2197 = vmatprep.subr.bf16.mxu0 0
        %2198 = vmatpush1.bf16.msra.mxu0 %v1614
        %2199 = vmatprep.subr.bf16.mxu0 0
        %2200 = vmatpush1.bf16.msra.mxu0 %v1615
        %2201 = vmatprep.subr.bf16.mxu0 0
        %2202 = vmatpush1.bf16.msra.mxu0 %v1616
        %2203 = vmatprep.subr.bf16.mxu0 0
        %2204 = vmatpush1.bf16.msra.mxu0 %v1617
        %2205 = vmatprep.subr.bf16.mxu0 0
        %2206 = vmatpush1.bf16.msra.mxu0 %v1618
        %2207 = vmatprep.subr.bf16.mxu0 0
        %2208 = vmatpush1.bf16.msra.mxu0 %v1619
        %2209 = vmatprep.subr.bf16.mxu0 0
        %2210 = vmatpush1.bf16.msra.mxu0 %v1620
        %2211 = vmatprep.subr.bf16.mxu0 0
        %2212 = vmatpush1.bf16.msra.mxu0 %v1621
        %2213 = vmatprep.subr.bf16.mxu0 0
        %2214 = vmatpush1.bf16.msra.mxu0 %v1622
        %2215 = vmatprep.mubr.bf16.mxu0 %v680
        %2216 = vmatmul.mubr.bf16.gmra.mrb[0].mxu0 %v679
        %v2217 = vpop.f32.mrb[0].mxu0
        %v2218 = vadd.f32 %v2178, %v2217
        %v2219 = vpop.f32.mrb[0].mxu0
        %v2220 = vpop.f32.mrb[0].mxu0
        %v2221 = vpop.f32.mrb[0].mxu0
        %2222 = vdwg.mxu0
        %2223 = vmatprep.subr.bf16.mxu0 0
        %2224 = vmatpush1.bf16.msra.mxu0 %v1623
        %2225 = vmatprep.subr.bf16.mxu0 0
        %2226 = vmatpush1.bf16.msra.mxu0 %v1624
        %2227 = vmatprep.subr.bf16.mxu0 0
        %2228 = vmatpush1.bf16.msra.mxu0 %v1625
        %2229 = vmatprep.subr.bf16.mxu0 0
        %2230 = vmatpush1.bf16.msra.mxu0 %v1626
        %2231 = vmatprep.subr.bf16.mxu0 0
        %2232 = vmatpush1.bf16.msra.mxu0 %v1627
        %2233 = vmatprep.subr.bf16.mxu0 0
        %2234 = vmatpush1.bf16.msra.mxu0 %v1628
        %2235 = vmatprep.subr.bf16.mxu0 0
        %2236 = vmatpush1.bf16.msra.mxu0 %v1629
        %2237 = vmatprep.subr.bf16.mxu0 0
        %2238 = vmatpush1.bf16.msra.mxu0 %v1630
        %2239 = vmatprep.subr.bf16.mxu0 0
        %2240 = vmatpush1.bf16.msra.mxu0 %v1631
        %2241 = vmatprep.subr.bf16.mxu0 0
        %2242 = vmatpush1.bf16.msra.mxu0 %v1632
        %2243 = vmatprep.subr.bf16.mxu0 0
        %2244 = vmatpush1.bf16.msra.mxu0 %v1633
        %2245 = vmatprep.subr.bf16.mxu0 0
        %2246 = vmatpush1.bf16.msra.mxu0 %v1634
        %2247 = vmatprep.subr.bf16.mxu0 0
        %2248 = vmatpush1.bf16.msra.mxu0 %v1635
        %2249 = vmatprep.subr.bf16.mxu0 0
        %2250 = vmatpush1.bf16.msra.mxu0 %v1636
        %2251 = vmatprep.subr.bf16.mxu0 0
        %2252 = vmatpush1.bf16.msra.mxu0 %v1637
        %2253 = vmatprep.subr.bf16.mxu0 0
        %2254 = vmatpush1.bf16.msra.mxu0 %v1638
        %2255 = vmatprep.mubr.bf16.mxu0 %v682
        %2256 = vmatmul.mubr.bf16.gmra.mrb[0].mxu0 %v681
        %v2257 = vpop.f32.mrb[0].mxu0
        %v2258 = vadd.f32 %v2218, %v2257
        %v2259 = vpop.f32.mrb[0].mxu0
        %v2260 = vpop.f32.mrb[0].mxu0
        %v2261 = vpop.f32.mrb[0].mxu0
        %2262 = vdwg.mxu0
        %2263 = vmatprep.subr.bf16.mxu0 0
        %2264 = vmatpush1.bf16.msra.mxu0 %v1639
        %2265 = vmatprep.subr.bf16.mxu0 0
        %2266 = vmatpush1.bf16.msra.mxu0 %v1640
        %2267 = vmatprep.subr.bf16.mxu0 0
        %2268 = vmatpush1.bf16.msra.mxu0 %v1641
        %2269 = vmatprep.subr.bf16.mxu0 0
        %2270 = vmatpush1.bf16.msra.mxu0 %v1642
        %2271 = vmatprep.subr.bf16.mxu0 0
        %2272 = vmatpush1.bf16.msra.mxu0 %v1643
        %2273 = vmatprep.subr.bf16.mxu0 0
        %2274 = vmatpush1.bf16.msra.mxu0 %v1644
        %2275 = vmatprep.subr.bf16.mxu0 0
        %2276 = vmatpush1.bf16.msra.mxu0 %v1645
        %2277 = vmatprep.subr.bf16.mxu0 0
        %2278 = vmatpush1.bf16.msra.mxu0 %v1646
        %2279 = vmatprep.subr.bf16.mxu0 0
        %2280 = vmatpush1.bf16.msra.mxu0 %v1647
        %2281 = vmatprep.subr.bf16.mxu0 0
        %2282 = vmatpush1.bf16.msra.mxu0 %v1648
        %2283 = vmatprep.subr.bf16.mxu0 0
        %2284 = vmatpush1.bf16.msra.mxu0 %v1649
        %2285 = vmatprep.subr.bf16.mxu0 0
        %2286 = vmatpush1.bf16.msra.mxu0 %v1650
        %2287 = vmatprep.subr.bf16.mxu0 0
        %2288 = vmatpush1.bf16.msra.mxu0 %v1651
        %2289 = vmatprep.subr.bf16.mxu0 0
        %2290 = vmatpush1.bf16.msra.mxu0 %v1652
        %2291 = vmatprep.subr.bf16.mxu0 0
        %2292 = vmatpush1.bf16.msra.mxu0 %v1653
        %2293 = vmatprep.subr.bf16.mxu0 0
        %2294 = vmatpush1.bf16.msra.mxu0 %v1654
        %2295 = vmatprep.mubr.bf16.mxu0 %v684
        %2296 = vmatmul.mubr.bf16.gmra.mrb[0].mxu0 %v683
        %v2297 = vpop.f32.mrb[0].mxu0
        %v2298 = vadd.f32 %v2258, %v2297
        %v2299 = vpop.f32.mrb[0].mxu0
        %v2300 = vpop.f32.mrb[0].mxu0
        %v2301 = vpop.f32.mrb[0].mxu0
        %2302 = vdwg.mxu0
        %2303 = vmatprep.subr.bf16.mxu0 0
        %2304 = vmatpush1.bf16.msra.mxu0 %v1655
        %2305 = vmatprep.subr.bf16.mxu0 0
        %2306 = vmatpush1.bf16.msra.mxu0 %v1656
        %2307 = vmatprep.subr.bf16.mxu0 0
        %2308 = vmatpush1.bf16.msra.mxu0 %v1657
        %2309 = vmatprep.subr.bf16.mxu0 0
        %2310 = vmatpush1.bf16.msra.mxu0 %v1658
        %2311 = vmatprep.subr.bf16.mxu0 0
        %2312 = vmatpush1.bf16.msra.mxu0 %v1659
        %2313 = vmatprep.subr.bf16.mxu0 0
        %2314 = vmatpush1.bf16.msra.mxu0 %v1660
        %2315 = vmatprep.subr.bf16.mxu0 0
        %2316 = vmatpush1.bf16.msra.mxu0 %v1661
        %2317 = vmatprep.subr.bf16.mxu0 0
        %2318 = vmatpush1.bf16.msra.mxu0 %v1662
        %2319 = vmatprep.subr.bf16.mxu0 0
        %2320 = vmatpush1.bf16.msra.mxu0 %v1663
        %2321 = vmatprep.subr.bf16.mxu0 0
        %2322 = vmatpush1.bf16.msra.mxu0 %v1664
        %2323 = vmatprep.subr.bf16.mxu0 0
        %2324 = vmatpush1.bf16.msra.mxu0 %v1665
        %2325 = vmatprep.subr.bf16.mxu0 0
        %2326 = vmatpush1.bf16.msra.mxu0 %v1666
        %2327 = vmatprep.subr.bf16.mxu0 0
        %2328 = vmatpush1.bf16.msra.mxu0 %v1667
        %2329 = vmatprep.subr.bf16.mxu0 0
        %2330 = vmatpush1.bf16.msra.mxu0 %v1668
        %2331 = vmatprep.subr.bf16.mxu0 0
        %2332 = vmatpush1.bf16.msra.mxu0 %v1669
        %2333 = vmatprep.subr.bf16.mxu0 0
        %2334 = vmatpush1.bf16.msra.mxu0 %v1670
        %2335 = vmatprep.mubr.bf16.mxu0 %v686
        %2336 = vmatmul.mubr.bf16.gmra.mrb[0].mxu0 %v685
        %v2337 = vpop.f32.mrb[0].mxu0
        %v2338 = vadd.f32 %v2298, %v2337
        %v2339 = vpop.f32.mrb[0].mxu0
        %v2340 = vpop.f32.mrb[0].mxu0
        %v2341 = vpop.f32.mrb[0].mxu0
        %2342 = vdwg.mxu0
        %v2343 = vxor.u32 %v2338, 2147483648
        %v2344 = vmul.f32 %v2343, 1.442695
        %v2345 = vpow.pop %v2344
        %v2346 = vadd.f32 %v2345, 1.0
        %v2347 = vrcp.pop %v2346
        %v2348 = vmul.f32 1.0, %v2347
        %v2349 = vmul.f32 %v2338, %v2348
        %v2350 = vld [vmem:[%s3] sm:$0xff]
        %v2351 = vld [vmem:[%s4] sm:$0xff]
        %2353 = vset.pattern.permute.xlu0 0
        %2354 = vperm.xlu0 %2353, %v2351
        %v2355 = vpop.permute.xlu0 %2354
        %vm2357 = vcmask 64512
        %v2359 = vsel %vm2357, %v2350, 0
        %2361 = vmatprep.subr.mxu0 0.0
        %2362 = vmatpush1.msra.mxu0 %v2349
        %2363 = vmatprep.subr.mxu0 0.0
        %2364 = vmatpush1.msra.mxu0 0.0
        %2365 = vmatprep.subr.mxu0 0.0
        %2366 = vmatpush1.msra.mxu0 0.0
        %2367 = vmatprep.subr.mxu0 0.0
        %2368 = vmatpush1.msra.mxu0 0.0
        %2369 = vmatprep.subr.mxu0 0.0
        %2370 = vmatpush1.msra.mxu0 0.0
        %2371 = vmatprep.subr.mxu0 0.0
        %2372 = vmatpush1.msra.mxu0 0.0
        %2373 = vmatprep.subr.mxu0 0.0
        %2374 = vmatpush1.msra.mxu0 0.0
        %2375 = vmatprep.subr.mxu0 0.0
        %2376 = vmatpush1.msra.mxu0 0.0
        %2377 = vmatprep.subr.mxu0 0.0
        %2378 = vmatpush1.msra.mxu0 0.0
        %2379 = vmatprep.subr.mxu0 0.0
        %2380 = vmatpush1.msra.mxu0 0.0
        %2381 = vmatprep.subr.mxu0 0.0
        %2382 = vmatpush1.msra.mxu0 0.0
        %2383 = vmatprep.subr.mxu0 0.0
        %2384 = vmatpush1.msra.mxu0 0.0
        %2385 = vmatprep.subr.mxu0 0.0
        %2386 = vmatpush1.msra.mxu0 0.0
        %2387 = vmatprep.subr.mxu0 0.0
        %2388 = vmatpush1.msra.mxu0 0.0
        %2389 = vmatprep.subr.mxu0 0.0
        %2390 = vmatpush1.msra.mxu0 0.0
        %2391 = vmatprep.subr.mxu0 0.0
        %2392 = vmatpush1.msra.mxu0 0.0
        %2393 = vmatprep.subr.mxu0 0.0
        %2394 = vmatpush1.msra.mxu0 0.0
        %2395 = vmatprep.subr.mxu0 0.0
        %2396 = vmatpush1.msra.mxu0 0.0
        %2397 = vmatprep.subr.mxu0 0.0
        %2398 = vmatpush1.msra.mxu0 0.0
        %2399 = vmatprep.subr.mxu0 0.0
        %2400 = vmatpush1.msra.mxu0 0.0
        %2401 = vmatprep.subr.mxu0 0.0
        %2402 = vmatpush1.msra.mxu0 0.0
        %2403 = vmatprep.subr.mxu0 0.0
        %2404 = vmatpush1.msra.mxu0 0.0
        %2405 = vmatprep.subr.mxu0 0.0
        %2406 = vmatpush1.msra.mxu0 0.0
        %2407 = vmatprep.subr.mxu0 0.0
        %2408 = vmatpush1.msra.mxu0 0.0
        %2409 = vmatprep.subr.mxu0 0.0
        %2410 = vmatpush1.msra.mxu0 0.0
        %2411 = vmatprep.subr.mxu0 0.0
        %2412 = vmatpush1.msra.mxu0 0.0
        %2413 = vmatprep.subr.mxu0 0.0
        %2414 = vmatpush1.msra.mxu0 0.0
        %2415 = vmatprep.subr.mxu0 0.0
        %2416 = vmatpush1.msra.mxu0 0.0
        %2417 = vmatprep.subr.mxu0 0.0
        %2418 = vmatpush1.msra.mxu0 0.0
        %2419 = vmatprep.subr.mxu0 0.0
        %2420 = vmatpush1.msra.mxu0 0.0
        %2421 = vmatprep.subr.mxu0 0.0
        %2422 = vmatpush1.msra.mxu0 0.0
        %2423 = vmatprep.subr.mxu0 0.0
        %2424 = vmatpush1.msra.mxu0 0.0
        %2425 = vmatprep.mubr.f32.mxu0 0.0
        %2426 = vmatmul.mubr.f32.gmra.mrb[0].mxu0 %v2359
        %v2427 = vpop.f32.mrb[0].mxu0
        %v2428 = vadd.f32 %v2355, %v2427
        %v2429 = vpop.f32.mrb[0].mxu0
        %2430 = vdwg.mxu0
        %vm2431 = vcmask 261120
        %2432 = vst.msk [vmem:[%s217] sm:$0xff] %vm2431, %v2428
        %s2433 = sand.u32 %s137, 1
        %s2434 = scalar_lea.sflag [#allocation3], %s2433
        %s2435 = sand.u32 %s137, 1
        %s2436 = smul.addr %s2435, 8
        %s2437 = scalar_lea.vmem [#allocation2], %s2436
        // Predicated region
        $region41: #{tpu_custom_call.1} parent=39 // pred_check
          %p2438 = pneg %p147
        $region42: #{tpu_custom_call.1} parent=39 // pred_check_branch
          %2440 = sbr.rel (%p2438) target = $region44
        $region43: #{tpu_custom_call.1} parent=39 // pred_region
          %s2442 = ssub.s32 128, 128
          %2443 = vsyncadd %s2434, %s2442
          %s2444 = smul.addr %s19, 128
          %s2445 = scalar_lea.hbm %s5, %s2444
          %s2447 = sshll.u32 %s2437, 4
          %s2448 = int_to_ptr.vmem [resolvable:$true] %s2447
          %2450 = dma.vmem_to_hbm [thread:$0]  %s2448, 128, %s2445, %s2434
        $region44: #{tpu_custom_call.1} parent=39 // pred_fallthru
          _
      $region40: #{tpu_custom_call.1} parent=5 // pred_fallthru
        _
      %p2451 = scmp.le.s32.totalorder 2, %s14
      // Predicated region
      $region45: #{tpu_custom_call.1} parent=5 // pred_check
        %p2452 = pneg %p2451
      $region46: #{tpu_custom_call.1} parent=5 // pred_check_branch
        %2454 = sbr.rel (%p2452) target = $region48
      $region47: #{tpu_custom_call.1} parent=5 // pred_region
        %s2455 = ssub.s32 %s14, 2
        // Predicated region
        $region49: #{tpu_custom_call.1} parent=47 // pred_check
          %p2456 = pneg %p153
        $region50: #{tpu_custom_call.1} parent=47 // pred_check_branch
          %2458 = sbr.rel (%p2456) target = $region52
        $region51: #{tpu_custom_call.1} parent=47 // pred_region
          %s2459 = sand.u32 %s138, 1
          %s2460 = scalar_lea.sflag [#allocation3], %s2459
          %s2461 = sand.u32 %s138, 1
          %s2462 = smul.addr %s2461, 8
          %s2463 = scalar_lea.vmem [#allocation2], %s2462
          %2464 = dma.done %s2460, 128
        $region52: #{tpu_custom_call.1} parent=47 // pred_fallthru
          _
      $region48: #{tpu_custom_call.1} parent=5 // pred_fallthru
        _
    $region6: #{tpu_custom_call.1} parent=1 // loop_footer
      %s18 = sadd.s32 1, %s14
    $region7: #{tpu_custom_call.1} parent=1 // loop_footer_branch
      %13 = sbr.rel target = $region3
    $region8: #{tpu_custom_call.1} parent=1 // loop_exit
      _
    %2465 = vsyncpa [#allocation3], 1
    %s2466 = scalar_lea.sflag [#allocation3], 1
    %2467 = vsyncpa %s2466, 1

</llo_original>
